<compile_context>
chip_gen: v6e
topology: v6e:2x2x1
jax: 0.10.0
libtpu: 0.0.40
codegen_flags: <defaults>
</compile_context>

<pallas_src>
import functools

import jax
import jax.numpy as jnp
from jax.experimental import pallas as pl
from jax.experimental.pallas import tpu as pltpu


# ---------------------------------------------------------------------------
# Pass 1: GroupNorm statistics (per-batch, per-channel sum & sum of squares).
# ---------------------------------------------------------------------------
def gn_stats_kernel(x_ref, sum_ref, sumsq_ref):
    x = x_ref[0]                                            # (HW, C) f32
    sum_ref[0] = jnp.sum(x, axis=0, keepdims=True)          # (1, C)
    sumsq_ref[0] = jnp.sum(x * x, axis=0, keepdims=True)    # (1, C)


# ---------------------------------------------------------------------------
# Pass 2: apply GroupNorm (precomputed per-(batch, channel) scale/shift) and
# compute the q / k / v 1x1-conv projections.  bf16 MXU operands, f32 acc.
# The attention scale C^-0.5 has been folded into wq / bq by the wrapper.
# ---------------------------------------------------------------------------
def qkv_kernel(x_ref, scale_ref, shift_ref,
               wq_ref, bq_ref, wk_ref, bk_ref, wv_ref, bv_ref,
               q_ref, k_ref, v_ref):
    x = x_ref[0]                                   # (TQ, C) f32
    h = x * scale_ref[0] + shift_ref[0]            # GroupNorm apply, f32 VPU
    hb = h.astype(jnp.bfloat16)
    q = jnp.dot(hb, wq_ref[...], preferred_element_type=jnp.float32) + bq_ref[...]
    k = jnp.dot(hb, wk_ref[...], preferred_element_type=jnp.float32) + bk_ref[...]
    v = jnp.dot(hb, wv_ref[...], preferred_element_type=jnp.float32) + bv_ref[...]
    q_ref[0] = q.astype(jnp.bfloat16)
    k_ref[0] = k.astype(jnp.bfloat16)
    v_ref[0] = v.astype(jnp.bfloat16)


# ---------------------------------------------------------------------------
# Pass 3: flash-style attention (online softmax over KV tiles) + proj_out +
# residual add.  Never materializes the full (HW, HW) score matrix.
# ---------------------------------------------------------------------------
def flash_attn_kernel(q_ref, k_ref, v_ref, x_ref, wp_ref, bp_ref, out_ref,
                      m_sc, l_sc, acc_sc):
    ki = pl.program_id(2)

    @pl.when(ki == 0)
    def _init():
        m_sc[...] = jnp.full(m_sc.shape, -jnp.inf, dtype=jnp.float32)
        l_sc[...] = jnp.zeros(l_sc.shape, dtype=jnp.float32)
        acc_sc[...] = jnp.zeros(acc_sc.shape, dtype=jnp.float32)

    q = q_ref[0]                                   # (TQ, C) bf16, scale folded
    k = k_ref[0]                                   # (TK, C) bf16
    s = jax.lax.dot_general(q, k, (((1,), (1,)), ((), ())),
                            preferred_element_type=jnp.float32)   # (TQ, TK) f32

    m_prev = m_sc[...]
    m_new = jnp.maximum(m_prev, jnp.max(s, axis=-1, keepdims=True))
    alpha = jnp.exp(m_prev - m_new)                # f32 softmax math (v5e safe)
    p = jnp.exp(s - m_new)
    l_sc[...] = alpha * l_sc[...] + jnp.sum(p, axis=-1, keepdims=True)
    acc_sc[...] = alpha * acc_sc[...] + jnp.dot(
        p.astype(jnp.bfloat16), v_ref[0], preferred_element_type=jnp.float32)
    m_sc[...] = m_new

    @pl.when(ki == pl.num_programs(2) - 1)
    def _finalize():
        inv_l = pl.reciprocal(l_sc[...], approx=True)
        attn = (acc_sc[...] * inv_l).astype(jnp.bfloat16)           # (TQ, C)
        proj = jnp.dot(attn, wp_ref[...],
                       preferred_element_type=jnp.float32) + bp_ref[...]
        out_ref[0] = x_ref[0] + proj               # residual in f32


# ---------------------------------------------------------------------------
# Wrapper
# ---------------------------------------------------------------------------
def _pick_tile(n):
    for t in (512, 256, 128):
        if n % t == 0:
            return t
    return n


@functools.partial(jax.jit, static_argnames=("num_groups",))
def attn_block(x_nchw, params, num_groups=32):
    """params: gamma/beta (C,), wq/wk/wv/wp (Cout, Cin), bq/bk/bv/bp (C,)."""
    B, C, H, W = x_nchw.shape
    HW = H * W
    G = num_groups
    assert C % G == 0, "GroupNorm requires C divisible by num_groups"
    gs = C // G
    f32, bf16 = jnp.float32, jnp.bfloat16

    # TODO(synk): fuse the NCHW<->NHWC layout change into producer/consumer ops
    # instead of standalone XLA transposes (extra HBM pass on v5e/v6e).
    x_flat = jnp.transpose(x_nchw, (0, 2, 3, 1)).reshape(B, HW, C).astype(f32)

    # ---- pass 1: GroupNorm statistics --------------------------------------
    sum_c, sumsq_c = pl.pallas_call(
        gn_stats_kernel,
        out_shape=(jax.ShapeDtypeStruct((B, 1, C), f32),
                   jax.ShapeDtypeStruct((B, 1, C), f32)),
        grid_spec=pltpu.PrefetchScalarGridSpec(
            num_scalar_prefetch=0,
            grid=(B,),
            in_specs=[pl.BlockSpec((1, HW, C), lambda b: (b, 0, 0))],
            out_specs=[pl.BlockSpec((1, 1, C), lambda b: (b, 0, 0)),
                       pl.BlockSpec((1, 1, C), lambda b: (b, 0, 0))]),
        compiler_params=pltpu.CompilerParams(dimension_semantics=("parallel",)),
        cost_estimate=pl.CostEstimate(
            flops=int(3 * B * HW * C), transcendentals=0,
            bytes_accessed=int(B * HW * C * 4 + 2 * B * C * 4)),
    )(x_flat)

    # Tiny (B, C) -> (B, G) group fold + affine fold (O(B*C), done at trace).
    n = float(HW * gs)
    sum_g = sum_c.reshape(B, G, gs).sum(axis=-1)
    sumsq_g = sumsq_c.reshape(B, G, gs).sum(axis=-1)
    mean_g = sum_g / n
    var_g = jnp.maximum(sumsq_g / n - mean_g * mean_g, 0.0)
    inv_std_g = jax.lax.rsqrt(var_g + 1e-6)
    mean_ch = jnp.repeat(mean_g, gs, axis=-1)          # (B, C)
    inv_std_ch = jnp.repeat(inv_std_g, gs, axis=-1)    # (B, C)
    gamma = params["gamma"].astype(f32)[None, :]
    beta = params["beta"].astype(f32)[None, :]
    gn_scale = (gamma * inv_std_ch).reshape(B, 1, C)
    gn_shift = (beta - gamma * mean_ch * inv_std_ch).reshape(B, 1, C)

    # 1x1 conv: out = x @ W.T + b.  Fold attention scale C^-0.5 into wq/bq.
    # MXU operands cast to bf16 (f32 accumulation inside the kernels).
    attn_scale = float(C) ** (-0.5)
    wq_t = (params["wq"].T.astype(f32) * attn_scale).astype(bf16)
    wk_t = params["wk"].T.astype(bf16)
    wv_t = params["wv"].T.astype(bf16)
    wp_t = params["wp"].T.astype(bf16)
    bq = (params["bq"].astype(f32) * attn_scale).reshape(1, C)
    bk = params["bk"].astype(f32).reshape(1, C)
    bv = params["bv"].astype(f32).reshape(1, C)
    bp = params["bp"].astype(f32).reshape(1, C)

    T = _pick_tile(HW)
    nt = HW // T

    rep2 = lambda shape: pl.BlockSpec(shape, lambda b, qi: (0,) * len(shape))
    rep3 = lambda shape: pl.BlockSpec(shape, lambda b, qi, ki: (0,) * len(shape))

    # ---- pass 2: normalize + q/k/v projections (query-tiled) ---------------
    q, k, v = pl.pallas_call(
        qkv_kernel,
        out_shape=(jax.ShapeDtypeStruct((B, HW, C), bf16),) * 3,
        grid_spec=pltpu.PrefetchScalarGridSpec(
            num_scalar_prefetch=0,
            grid=(B, nt),
            in_specs=[
                pl.BlockSpec((1, T, C), lambda b, qi: (b, qi, 0)),   # x
                pl.BlockSpec((1, 1, C), lambda b, qi: (b, 0, 0)),    # gn scale
                pl.BlockSpec((1, 1, C), lambda b, qi: (b, 0, 0)),    # gn shift
                rep2((C, C)), rep2((1, C)),                          # wq, bq
                rep2((C, C)), rep2((1, C)),                          # wk, bk
                rep2((C, C)), rep2((1, C)),                          # wv, bv
            ],
            out_specs=[pl.BlockSpec((1, T, C), lambda b, qi: (b, qi, 0))] * 3),
        compiler_params=pltpu.CompilerParams(
            dimension_semantics=("parallel", "parallel")),
        cost_estimate=pl.CostEstimate(
            flops=int(6 * B * HW * C * C), transcendentals=0,
            bytes_accessed=int(B * HW * C * (4 + 3 * 2) + 3 * (C * C * 2 + C * 4))),
    )(x_flat, gn_scale, gn_shift, wq_t, bq, wk_t, bk, wv_t, bv)

    # ---- pass 3: flash attention + proj_out + residual ---------------------
    out_flat = pl.pallas_call(
        flash_attn_kernel,
        out_shape=jax.ShapeDtypeStruct((B, HW, C), f32),
        grid_spec=pltpu.PrefetchScalarGridSpec(
            num_scalar_prefetch=0,
            grid=(B, nt, nt),
            in_specs=[
                pl.BlockSpec((1, T, C), lambda b, qi, ki: (b, qi, 0)),   # q
                pl.BlockSpec((1, T, C), lambda b, qi, ki: (b, ki, 0)),   # k
                pl.BlockSpec((1, T, C), lambda b, qi, ki: (b, ki, 0)),   # v
                pl.BlockSpec((1, T, C), lambda b, qi, ki: (b, qi, 0)),   # x (residual)
                rep3((C, C)), rep3((1, C)),                              # wp, bp
            ],
            out_specs=pl.BlockSpec((1, T, C), lambda b, qi, ki: (b, qi, 0)),
            scratch_shapes=[pltpu.VMEM((T, 1), jnp.float32),   # running max
                            pltpu.VMEM((T, 1), jnp.float32),   # running sum
                            pltpu.VMEM((T, C), jnp.float32)]), # accumulator
        compiler_params=pltpu.CompilerParams(
            dimension_semantics=("parallel", "parallel", "arbitrary")),
        cost_estimate=pl.CostEstimate(
            flops=int(B * (4 * HW * HW * C + 2 * HW * C * C)),
            transcendentals=int(B * HW * HW),
            bytes_accessed=int(B * HW * C * (3 * 2 + 4 + 4) + C * C * 2 + C * 4)),
    )(q, k, v, x_flat, wp_t, bp)

    return out_flat.reshape(B, H, W, C).transpose(0, 3, 1, 2)


# ---------------------------------------------------------------------------
# Pure-JAX f32 reference (correctness sanity check)
# ---------------------------------------------------------------------------
def attn_block_ref(x, params, num_groups=32):
    B, C, H, W = x.shape
    G = num_groups
    gs = C // G
    xg = x.reshape(B, G, gs, H, W)
    mean = xg.mean(axis=(2, 3, 4), keepdims=True)
    var = xg.var(axis=(2, 3, 4), keepdims=True)
    h = ((xg - mean) / jnp.sqrt(var + 1e-6)).reshape(B, C, H, W)
    h = h * params["gamma"][None, :, None, None] + params["beta"][None, :, None, None]

    def conv1x1(t, w, b):
        return jnp.einsum("bchw,oc->bohw", t, w) + b[None, :, None, None]

    q = conv1x1(h, params["wq"], params["bq"]).reshape(B, C, H * W)
    k = conv1x1(h, params["wk"], params["bk"]).reshape(B, C, H * W)
    v = conv1x1(h, params["wv"], params["bv"]).reshape(B, C, H * W)
    q = jnp.transpose(q, (0, 2, 1))                    # (B, HW, C)
    w_ = jnp.einsum("bic,bcj->bij", q, k) * (float(C) ** -0.5)
    w_ = jax.nn.softmax(w_, axis=2)
    out = jnp.einsum("bcj,bij->bci", v, w_).reshape(B, C, H, W)
    out = conv1x1(out, params["wp"], params["bp"])
    return x + out


# ---------------------------------------------------------------------------
# Main
# ---------------------------------------------------------------------------
if __name__ == "__main__":
    key = jax.random.PRNGKey(0)
    B, C, H, W = 2, 64, 8, 8          # C must be divisible by num_groups=32
    ks = jax.random.split(key, 11)

    x = jax.random.normal(ks[0], (B, C, H, W), dtype=jnp.float32)
    params = {
        "gamma": jax.random.normal(ks[1], (C,), dtype=jnp.float32) * 0.1 + 1.0,
        "beta":  jax.random.normal(ks[2], (C,), dtype=jnp.float32) * 0.1,
        "wq": jax.random.normal(ks[3], (C, C), dtype=jnp.float32) * 0.1,
        "wk": jax.random.normal(ks[4], (C, C), dtype=jnp.float32) * 0.1,
        "wv": jax.random.normal(ks[5], (C, C), dtype=jnp.float32) * 0.1,
        "wp": jax.random.normal(ks[6], (C, C), dtype=jnp.float32) * 0.1,
        "bq": jax.random.normal(ks[7], (C,), dtype=jnp.float32) * 0.1,
        "bk": jax.random.normal(ks[8], (C,), dtype=jnp.float32) * 0.1,
        "bv": jax.random.normal(ks[9], (C,), dtype=jnp.float32) * 0.1,
        "bp": jax.random.normal(ks[10], (C,), dtype=jnp.float32) * 0.1,
    }

    out = attn_block(x, params)
    out = jax.block_until_ready(out)

    ref = attn_block_ref(x, params)
    assert out.shape == (B, C, H, W)
    max_err = float(jnp.max(jnp.abs(out - ref)))
    # bf16 MXU operands + approx reciprocal -> compare with a looser tolerance.
    assert jnp.allclose(out, ref, atol=3e-2, rtol=3e-2), max_err

    print("KERNEL_OK")
</pallas_src>

<mosaic_0001>
module attributes {stable_mosaic.version = 11 : i64} {
  func.func @gn_stats_kernel(%arg0: i32, %arg1: memref<1x64x64xf32, #tpu.memory_space<vmem>>, %arg2: memref<1x1x64xf32, #tpu.memory_space<vmem>>, %arg3: memref<1x1x64xf32, #tpu.memory_space<vmem>>) attributes {dimension_semantics = [#tpu.dimension_semantics<parallel>], iteration_bounds = array<i64: 2>, scalar_prefetch = 0 : i64, scratch_operands = 0 : i64, tpu.core_type = #tpu.core_type<tc>, window_params = [{transform_indices = @transform_0, window_bounds = array<i64: 1, 64, 64>}, {transform_indices = @transform_1, window_bounds = array<i64: 1, 1, 64>}, {transform_indices = @transform_2, window_bounds = array<i64: 1, 1, 64>}]} {
    %c0 = arith.constant 0 : index
    %c0_0 = arith.constant 0 : index
    %c0_1 = arith.constant 0 : index
    %0 = vector.load %arg1[%c0, %c0_0, %c0_1] : memref<1x64x64xf32, #tpu.memory_space<vmem>>, vector<1x64x64xf32>
    %1 = vector.shape_cast %0 : vector<1x64x64xf32> to vector<64x64xf32>
    %cst = arith.constant dense<0.000000e+00> : vector<64xf32>
    %2 = vector.multi_reduction <add>, %1, %cst [0] : vector<64x64xf32> to vector<64xf32>
    %3 = vector.shape_cast %2 : vector<64xf32> to vector<1x64xf32>
    %c0_2 = arith.constant 0 : index
    %c0_3 = arith.constant 0 : index
    %c0_4 = arith.constant 0 : index
    %4 = vector.load %arg2[%c0_2, %c0_3, %c0_4] : memref<1x1x64xf32, #tpu.memory_space<vmem>>, vector<1x1x64xf32>
    %5 = vector.shape_cast %4 : vector<1x1x64xf32> to vector<1x64xf32>
    %6 = vector.shape_cast %3 : vector<1x64xf32> to vector<1x1x64xf32>
    tpu.vector_store %arg2[%c0_2, %c0_3, %c0_4], %6 {strides = array<i32>} : memref<1x1x64xf32, #tpu.memory_space<vmem>>, vector<1x1x64xf32>,
    %7 = arith.mulf %1, %1 : vector<64x64xf32>
    %cst_5 = arith.constant dense<0.000000e+00> : vector<64xf32>
    %8 = vector.multi_reduction <add>, %7, %cst_5 [0] : vector<64x64xf32> to vector<64xf32>
    %9 = vector.shape_cast %8 : vector<64xf32> to vector<1x64xf32>
    %c0_6 = arith.constant 0 : index
    %c0_7 = arith.constant 0 : index
    %c0_8 = arith.constant 0 : index
    %10 = vector.load %arg3[%c0_6, %c0_7, %c0_8] : memref<1x1x64xf32, #tpu.memory_space<vmem>>, vector<1x1x64xf32>
    %11 = vector.shape_cast %10 : vector<1x1x64xf32> to vector<1x64xf32>
    %12 = vector.shape_cast %9 : vector<1x64xf32> to vector<1x1x64xf32>
    tpu.vector_store %arg3[%c0_6, %c0_7, %c0_8], %12 {strides = array<i32>} : memref<1x1x64xf32, #tpu.memory_space<vmem>>, vector<1x1x64xf32>,
    return
  }
  func.func @transform_0(%arg0: i32) -> (i32, i32, i32) {
    %c0_i32 = arith.constant 0 : i32
    %c0_i32_0 = arith.constant 0 : i32
    %c0_i32_1 = arith.constant 0 : i32
    return %arg0, %c0_i32, %c0_i32_0 : i32, i32, i32
  }
  func.func @transform_1(%arg0: i32) -> (i32, i32, i32) {
    %c0_i32 = arith.constant 0 : i32
    %c0_i32_0 = arith.constant 0 : i32
    %c0_i32_1 = arith.constant 0 : i32
    return %arg0, %c0_i32, %c0_i32_0 : i32, i32, i32
  }
  func.func @transform_2(%arg0: i32) -> (i32, i32, i32) {
    %c0_i32 = arith.constant 0 : i32
    %c0_i32_0 = arith.constant 0 : i32
    %c0_i32_1 = arith.constant 0 : i32
    return %arg0, %c0_i32, %c0_i32_0 : i32, i32, i32
  }
}

module attributes {stable_mosaic.version = 11 : i64} {
  func.func @qkv_kernel(%arg0: i32, %arg1: i32, %arg2: memref<1x64x64xf32, #tpu.memory_space<vmem>>, %arg3: memref<1x1x64xf32, #tpu.memory_space<vmem>>, %arg4: memref<1x1x64xf32, #tpu.memory_space<vmem>>, %arg5: memref<64x64xbf16, #tpu.memory_space<vmem>>, %arg6: memref<1x64xf32, #tpu.memory_space<vmem>>, %arg7: memref<64x64xbf16, #tpu.memory_space<vmem>>, %arg8: memref<1x64xf32, #tpu.memory_space<vmem>>, %arg9: memref<64x64xbf16, #tpu.memory_space<vmem>>, %arg10: memref<1x64xf32, #tpu.memory_space<vmem>>, %arg11: memref<1x64x64xbf16, #tpu.memory_space<vmem>>, %arg12: memref<1x64x64xbf16, #tpu.memory_space<vmem>>, %arg13: memref<1x64x64xbf16, #tpu.memory_space<vmem>>) attributes {dimension_semantics = [#tpu.dimension_semantics<parallel>, #tpu.dimension_semantics<parallel>], iteration_bounds = array<i64: 2, 1>, scalar_prefetch = 0 : i64, scratch_operands = 0 : i64, tpu.core_type = #tpu.core_type<tc>, window_params = [{transform_indices = @transform_0, window_bounds = array<i64: 1, 64, 64>}, {transform_indices = @transform_1, window_bounds = array<i64: 1, 1, 64>}, {transform_indices = @transform_2, window_bounds = array<i64: 1, 1, 64>}, {pipeline_mode = #tpu.pipeline_mode<synchronous>, transform_indices = @transform_3, window_bounds = array<i64: 64, 64>}, {pipeline_mode = #tpu.pipeline_mode<synchronous>, transform_indices = @transform_4, window_bounds = array<i64: 1, 64>}, {pipeline_mode = #tpu.pipeline_mode<synchronous>, transform_indices = @transform_5, window_bounds = array<i64: 64, 64>}, {pipeline_mode = #tpu.pipeline_mode<synchronous>, transform_indices = @transform_6, window_bounds = array<i64: 1, 64>}, {pipeline_mode = #tpu.pipeline_mode<synchronous>, transform_indices = @transform_7, window_bounds = array<i64: 64, 64>}, {pipeline_mode = #tpu.pipeline_mode<synchronous>, transform_indices = @transform_8, window_bounds = array<i64: 1, 64>}, {transform_indices = @transform_9, window_bounds = array<i64: 1, 64, 64>}, {transform_indices = @transform_10, window_bounds = array<i64: 1, 64, 64>}, {transform_indices = @transform_11, window_bounds = array<i64: 1, 64, 64>}]} {
    %c0 = arith.constant 0 : index
    %c0_0 = arith.constant 0 : index
    %c0_1 = arith.constant 0 : index
    %0 = vector.load %arg2[%c0, %c0_0, %c0_1] : memref<1x64x64xf32, #tpu.memory_space<vmem>>, vector<1x64x64xf32>
    %1 = vector.shape_cast %0 : vector<1x64x64xf32> to vector<64x64xf32>
    %c0_2 = arith.constant 0 : index
    %c0_3 = arith.constant 0 : index
    %c0_4 = arith.constant 0 : index
    %2 = vector.load %arg3[%c0_2, %c0_3, %c0_4] : memref<1x1x64xf32, #tpu.memory_space<vmem>>, vector<1x1x64xf32>
    %3 = vector.shape_cast %2 : vector<1x1x64xf32> to vector<1x64xf32>
    %4 = vector.broadcast %3 : vector<1x64xf32> to vector<64x64xf32>
    %5 = arith.mulf %1, %4 : vector<64x64xf32>
    %c0_5 = arith.constant 0 : index
    %c0_6 = arith.constant 0 : index
    %c0_7 = arith.constant 0 : index
    %6 = vector.load %arg4[%c0_5, %c0_6, %c0_7] : memref<1x1x64xf32, #tpu.memory_space<vmem>>, vector<1x1x64xf32>
    %7 = vector.shape_cast %6 : vector<1x1x64xf32> to vector<1x64xf32>
    %8 = vector.broadcast %7 : vector<1x64xf32> to vector<64x64xf32>
    %9 = arith.addf %5, %8 : vector<64x64xf32>
    %10 = arith.truncf %9 : vector<64x64xf32> to vector<64x64xbf16>
    %c0_8 = arith.constant 0 : index
    %c0_9 = arith.constant 0 : index
    %11 = vector.load %arg5[%c0_8, %c0_9] : memref<64x64xbf16, #tpu.memory_space<vmem>>, vector<64x64xbf16>
    %cst = arith.constant dense<0.000000e+00> : vector<64x64xf32>
    %12 = tpu.matmul %10, %11, %cst {dimension_numbers = #tpu.dot_dimension_numbers<[1], [0], [0], [1], [0, 0, 1, 1], [], []>} : vector<64x64xbf16>, vector<64x64xbf16>, vector<64x64xf32> -> vector<64x64xf32>
    %c0_10 = arith.constant 0 : index
    %c0_11 = arith.constant 0 : index
    %13 = vector.load %arg6[%c0_10, %c0_11] : memref<1x64xf32, #tpu.memory_space<vmem>>, vector<1x64xf32>
    %14 = vector.broadcast %13 : vector<1x64xf32> to vector<64x64xf32>
    %15 = arith.addf %12, %14 : vector<64x64xf32>
    %c0_12 = arith.constant 0 : index
    %c0_13 = arith.constant 0 : index
    %16 = vector.load %arg7[%c0_12, %c0_13] : memref<64x64xbf16, #tpu.memory_space<vmem>>, vector<64x64xbf16>
    %cst_14 = arith.constant dense<0.000000e+00> : vector<64x64xf32>
    %17 = tpu.matmul %10, %16, %cst_14 {dimension_numbers = #tpu.dot_dimension_numbers<[1], [0], [0], [1], [0, 0, 1, 1], [], []>} : vector<64x64xbf16>, vector<64x64xbf16>, vector<64x64xf32> -> vector<64x64xf32>
    %c0_15 = arith.constant 0 : index
    %c0_16 = arith.constant 0 : index
    %18 = vector.load %arg8[%c0_15, %c0_16] : memref<1x64xf32, #tpu.memory_space<vmem>>, vector<1x64xf32>
    %19 = vector.broadcast %18 : vector<1x64xf32> to vector<64x64xf32>
    %20 = arith.addf %17, %19 : vector<64x64xf32>
    %c0_17 = arith.constant 0 : index
    %c0_18 = arith.constant 0 : index
    %21 = vector.load %arg9[%c0_17, %c0_18] : memref<64x64xbf16, #tpu.memory_space<vmem>>, vector<64x64xbf16>
    %cst_19 = arith.constant dense<0.000000e+00> : vector<64x64xf32>
    %22 = tpu.matmul %10, %21, %cst_19 {dimension_numbers = #tpu.dot_dimension_numbers<[1], [0], [0], [1], [0, 0, 1, 1], [], []>} : vector<64x64xbf16>, vector<64x64xbf16>, vector<64x64xf32> -> vector<64x64xf32>
    %c0_20 = arith.constant 0 : index
    %c0_21 = arith.constant 0 : index
    %23 = vector.load %arg10[%c0_20, %c0_21] : memref<1x64xf32, #tpu.memory_space<vmem>>, vector<1x64xf32>
    %24 = vector.broadcast %23 : vector<1x64xf32> to vector<64x64xf32>
    %25 = arith.addf %22, %24 : vector<64x64xf32>
    %26 = arith.truncf %15 : vector<64x64xf32> to vector<64x64xbf16>
    %c0_22 = arith.constant 0 : index
    %c0_23 = arith.constant 0 : index
    %c0_24 = arith.constant 0 : index
    %27 = vector.load %arg11[%c0_22, %c0_23, %c0_24] : memref<1x64x64xbf16, #tpu.memory_space<vmem>>, vector<1x64x64xbf16>
    %28 = vector.shape_cast %27 : vector<1x64x64xbf16> to vector<64x64xbf16>
    %29 = vector.shape_cast %26 : vector<64x64xbf16> to vector<1x64x64xbf16>
    tpu.vector_store %arg11[%c0_22, %c0_23, %c0_24], %29 {strides = array<i32>} : memref<1x64x64xbf16, #tpu.memory_space<vmem>>, vector<1x64x64xbf16>,
    %30 = arith.truncf %20 : vector<64x64xf32> to vector<64x64xbf16>
    %c0_25 = arith.constant 0 : index
    %c0_26 = arith.constant 0 : index
    %c0_27 = arith.constant 0 : index
    %31 = vector.load %arg12[%c0_25, %c0_26, %c0_27] : memref<1x64x64xbf16, #tpu.memory_space<vmem>>, vector<1x64x64xbf16>
    %32 = vector.shape_cast %31 : vector<1x64x64xbf16> to vector<64x64xbf16>
    %33 = vector.shape_cast %30 : vector<64x64xbf16> to vector<1x64x64xbf16>
    tpu.vector_store %arg12[%c0_25, %c0_26, %c0_27], %33 {strides = array<i32>} : memref<1x64x64xbf16, #tpu.memory_space<vmem>>, vector<1x64x64xbf16>,
    %34 = arith.truncf %25 : vector<64x64xf32> to vector<64x64xbf16>
    %c0_28 = arith.constant 0 : index
    %c0_29 = arith.constant 0 : index
    %c0_30 = arith.constant 0 : index
    %35 = vector.load %arg13[%c0_28, %c0_29, %c0_30] : memref<1x64x64xbf16, #tpu.memory_space<vmem>>, vector<1x64x64xbf16>
    %36 = vector.shape_cast %35 : vector<1x64x64xbf16> to vector<64x64xbf16>
    %37 = vector.shape_cast %34 : vector<64x64xbf16> to vector<1x64x64xbf16>
    tpu.vector_store %arg13[%c0_28, %c0_29, %c0_30], %37 {strides = array<i32>} : memref<1x64x64xbf16, #tpu.memory_space<vmem>>, vector<1x64x64xbf16>,
    return
  }
  func.func @transform_0(%arg0: i32, %arg1: i32) -> (i32, i32, i32) {
    %c0_i32 = arith.constant 0 : i32
    %c0_i32_0 = arith.constant 0 : i32
    return %arg0, %arg1, %c0_i32 : i32, i32, i32
  }
  func.func @transform_1(%arg0: i32, %arg1: i32) -> (i32, i32, i32) {
    %c0_i32 = arith.constant 0 : i32
    %c0_i32_0 = arith.constant 0 : i32
    %c0_i32_1 = arith.constant 0 : i32
    return %arg0, %c0_i32, %c0_i32_0 : i32, i32, i32
  }
  func.func @transform_2(%arg0: i32, %arg1: i32) -> (i32, i32, i32) {
    %c0_i32 = arith.constant 0 : i32
    %c0_i32_0 = arith.constant 0 : i32
    %c0_i32_1 = arith.constant 0 : i32
    return %arg0, %c0_i32, %c0_i32_0 : i32, i32, i32
  }
  func.func @transform_3(%arg0: i32, %arg1: i32) -> (i32, i32) {
    %c0_i32 = arith.constant 0 : i32
    %c0_i32_0 = arith.constant 0 : i32
    %c0_i32_1 = arith.constant 0 : i32
    return %c0_i32, %c0_i32_0 : i32, i32
  }
  func.func @transform_4(%arg0: i32, %arg1: i32) -> (i32, i32) {
    %c0_i32 = arith.constant 0 : i32
    %c0_i32_0 = arith.constant 0 : i32
    %c0_i32_1 = arith.constant 0 : i32
    return %c0_i32, %c0_i32_0 : i32, i32
  }
  func.func @transform_5(%arg0: i32, %arg1: i32) -> (i32, i32) {
    %c0_i32 = arith.constant 0 : i32
    %c0_i32_0 = arith.constant 0 : i32
    %c0_i32_1 = arith.constant 0 : i32
    return %c0_i32, %c0_i32_0 : i32, i32
  }
  func.func @transform_6(%arg0: i32, %arg1: i32) -> (i32, i32) {
    %c0_i32 = arith.constant 0 : i32
    %c0_i32_0 = arith.constant 0 : i32
    %c0_i32_1 = arith.constant 0 : i32
    return %c0_i32, %c0_i32_0 : i32, i32
  }
  func.func @transform_7(%arg0: i32, %arg1: i32) -> (i32, i32) {
    %c0_i32 = arith.constant 0 : i32
    %c0_i32_0 = arith.constant 0 : i32
    %c0_i32_1 = arith.constant 0 : i32
    return %c0_i32, %c0_i32_0 : i32, i32
  }
  func.func @transform_8(%arg0: i32, %arg1: i32) -> (i32, i32) {
    %c0_i32 = arith.constant 0 : i32
    %c0_i32_0 = arith.constant 0 : i32
    %c0_i32_1 = arith.constant 0 : i32
    return %c0_i32, %c0_i32_0 : i32, i32
  }
  func.func @transform_9(%arg0: i32, %arg1: i32) -> (i32, i32, i32) {
    %c0_i32 = arith.constant 0 : i32
    %c0_i32_0 = arith.constant 0 : i32
    return %arg0, %arg1, %c0_i32 : i32, i32, i32
  }
  func.func @transform_10(%arg0: i32, %arg1: i32) -> (i32, i32, i32) {
    %c0_i32 = arith.constant 0 : i32
    %c0_i32_0 = arith.constant 0 : i32
    return %arg0, %arg1, %c0_i32 : i32, i32, i32
  }
  func.func @transform_11(%arg0: i32, %arg1: i32) -> (i32, i32, i32) {
    %c0_i32 = arith.constant 0 : i32
    %c0_i32_0 = arith.constant 0 : i32
    return %arg0, %arg1, %c0_i32 : i32, i32, i32
  }
}

module attributes {stable_mosaic.version = 11 : i64} {
  func.func @flash_attn_kernel(%arg0: i32, %arg1: i32, %arg2: i32, %arg3: memref<1x64x64xbf16, #tpu.memory_space<vmem>>, %arg4: memref<1x64x64xbf16, #tpu.memory_space<vmem>>, %arg5: memref<1x64x64xbf16, #tpu.memory_space<vmem>>, %arg6: memref<1x64x64xf32, #tpu.memory_space<vmem>>, %arg7: memref<64x64xbf16, #tpu.memory_space<vmem>>, %arg8: memref<1x64xf32, #tpu.memory_space<vmem>>, %arg9: memref<1x64x64xf32, #tpu.memory_space<vmem>>, %arg10: memref<64x1xf32, #tpu.memory_space<vmem>>, %arg11: memref<64x1xf32, #tpu.memory_space<vmem>>, %arg12: memref<64x64xf32, #tpu.memory_space<vmem>>) attributes {dimension_semantics = [#tpu.dimension_semantics<parallel>, #tpu.dimension_semantics<parallel>, #tpu.dimension_semantics<arbitrary>], iteration_bounds = array<i64: 2, 1, 1>, scalar_prefetch = 0 : i64, scratch_operands = 3 : i64, tpu.core_type = #tpu.core_type<tc>, window_params = [{transform_indices = @transform_0, window_bounds = array<i64: 1, 64, 64>}, {transform_indices = @transform_1, window_bounds = array<i64: 1, 64, 64>}, {transform_indices = @transform_2, window_bounds = array<i64: 1, 64, 64>}, {transform_indices = @transform_3, window_bounds = array<i64: 1, 64, 64>}, {pipeline_mode = #tpu.pipeline_mode<synchronous>, transform_indices = @transform_4, window_bounds = array<i64: 64, 64>}, {pipeline_mode = #tpu.pipeline_mode<synchronous>, transform_indices = @transform_5, window_bounds = array<i64: 1, 64>}, {transform_indices = @transform_6, window_bounds = array<i64: 1, 64, 64>}]} {
    %c0_i32 = arith.constant 0 : i32
    %0 = arith.cmpi eq, %arg2, %c0_i32 : i32
    %1 = arith.extui %0 : i1 to i32
    %c0_i32_0 = arith.constant 0 : i32
    %2 = arith.cmpi ne, %1, %c0_i32_0 : i32
    scf.if %2 {
      %cst_26 = arith.constant 0xFF800000 : f32
      %36 = vector.broadcast %cst_26 : f32 to vector<64x1xf32>
      %c0_27 = arith.constant 0 : index
      %c0_28 = arith.constant 0 : index
      %37 = vector.load %arg10[%c0_27, %c0_28] : memref<64x1xf32, #tpu.memory_space<vmem>>, vector<64x1xf32>
      tpu.vector_store %arg10[%c0_27, %c0_28], %36 {strides = array<i32>} : memref<64x1xf32, #tpu.memory_space<vmem>>, vector<64x1xf32>,
      %cst_29 = arith.constant 0.000000e+00 : f32
      %38 = vector.broadcast %cst_29 : f32 to vector<64x1xf32>
      %c0_30 = arith.constant 0 : index
      %c0_31 = arith.constant 0 : index
      %39 = vector.load %arg11[%c0_30, %c0_31] : memref<64x1xf32, #tpu.memory_space<vmem>>, vector<64x1xf32>
      tpu.vector_store %arg11[%c0_30, %c0_31], %38 {strides = array<i32>} : memref<64x1xf32, #tpu.memory_space<vmem>>, vector<64x1xf32>,
      %cst_32 = arith.constant 0.000000e+00 : f32
      %40 = vector.broadcast %cst_32 : f32 to vector<64x64xf32>
      %c0_33 = arith.constant 0 : index
      %c0_34 = arith.constant 0 : index
      %41 = vector.load %arg12[%c0_33, %c0_34] : memref<64x64xf32, #tpu.memory_space<vmem>>, vector<64x64xf32>
      tpu.vector_store %arg12[%c0_33, %c0_34], %40 {strides = array<i32>} : memref<64x64xf32, #tpu.memory_space<vmem>>, vector<64x64xf32>,
    } else {
    }
    %c0 = arith.constant 0 : index
    %c0_1 = arith.constant 0 : index
    %c0_2 = arith.constant 0 : index
    %3 = vector.load %arg3[%c0, %c0_1, %c0_2] : memref<1x64x64xbf16, #tpu.memory_space<vmem>>, vector<1x64x64xbf16>
    %4 = vector.shape_cast %3 : vector<1x64x64xbf16> to vector<64x64xbf16>
    %c0_3 = arith.constant 0 : index
    %c0_4 = arith.constant 0 : index
    %c0_5 = arith.constant 0 : index
    %5 = vector.load %arg4[%c0_3, %c0_4, %c0_5] : memref<1x64x64xbf16, #tpu.memory_space<vmem>>, vector<1x64x64xbf16>
    %6 = vector.shape_cast %5 : vector<1x64x64xbf16> to vector<64x64xbf16>
    %cst = arith.constant dense<0.000000e+00> : vector<64x64xf32>
    %7 = tpu.matmul %4, %6, %cst {dimension_numbers = #tpu.dot_dimension_numbers<[1], [1], [0], [0], [0, 0, 1, 0], [], []>} : vector<64x64xbf16>, vector<64x64xbf16>, vector<64x64xf32> -> vector<64x64xf32>
    %c0_6 = arith.constant 0 : index
    %c0_7 = arith.constant 0 : index
    %8 = vector.load %arg10[%c0_6, %c0_7] : memref<64x1xf32, #tpu.memory_space<vmem>>, vector<64x1xf32>
    %cst_8 = arith.constant dense<0xFF800000> : vector<64xf32>
    %9 = vector.multi_reduction <maximumf>, %7, %cst_8 [1] : vector<64x64xf32> to vector<64xf32>
    %10 = vector.shape_cast %9 : vector<64xf32> to vector<64x1xf32>
    %11 = arith.maximumf %8, %10 : vector<64x1xf32>
    %12 = arith.subf %8, %11 : vector<64x1xf32>
    %13 = math.exp %12 : vector<64x1xf32>
    %14 = vector.broadcast %11 : vector<64x1xf32> to vector<64x64xf32>
    %15 = arith.subf %7, %14 : vector<64x64xf32>
    %16 = math.exp %15 : vector<64x64xf32>
    %c0_9 = arith.constant 0 : index
    %c0_10 = arith.constant 0 : index
    %17 = vector.load %arg11[%c0_9, %c0_10] : memref<64x1xf32, #tpu.memory_space<vmem>>, vector<64x1xf32>
    %18 = arith.mulf %13, %17 : vector<64x1xf32>
    %cst_11 = arith.constant dense<0.000000e+00> : vector<64xf32>
    %19 = vector.multi_reduction <add>, %16, %cst_11 [1] : vector<64x64xf32> to vector<64xf32>
    %20 = vector.shape_cast %19 : vector<64xf32> to vector<64x1xf32>
    %21 = arith.addf %18, %20 : vector<64x1xf32>
    %c0_12 = arith.constant 0 : index
    %c0_13 = arith.constant 0 : index
    %22 = vector.load %arg11[%c0_12, %c0_13] : memref<64x1xf32, #tpu.memory_space<vmem>>, vector<64x1xf32>
    tpu.vector_store %arg11[%c0_12, %c0_13], %21 {strides = array<i32>} : memref<64x1xf32, #tpu.memory_space<vmem>>, vector<64x1xf32>,
    %c0_14 = arith.constant 0 : index
    %c0_15 = arith.constant 0 : index
    %23 = vector.load %arg12[%c0_14, %c0_15] : memref<64x64xf32, #tpu.memory_space<vmem>>, vector<64x64xf32>
    %24 = vector.broadcast %13 : vector<64x1xf32> to vector<64x64xf32>
    %25 = arith.mulf %24, %23 : vector<64x64xf32>
    %26 = arith.truncf %16 : vector<64x64xf32> to vector<64x64xbf16>
    %c0_16 = arith.constant 0 : index
    %c0_17 = arith.constant 0 : index
    %c0_18 = arith.constant 0 : index
    %27 = vector.load %arg5[%c0_16, %c0_17, %c0_18] : memref<1x64x64xbf16, #tpu.memory_space<vmem>>, vector<1x64x64xbf16>
    %28 = vector.shape_cast %27 : vector<1x64x64xbf16> to vector<64x64xbf16>
    %cst_19 = arith.constant dense<0.000000e+00> : vector<64x64xf32>
    %29 = tpu.matmul %26, %28, %cst_19 {dimension_numbers = #tpu.dot_dimension_numbers<[1], [0], [0], [1], [0, 0, 1, 1], [], []>} : vector<64x64xbf16>, vector<64x64xbf16>, vector<64x64xf32> -> vector<64x64xf32>
    %30 = arith.addf %25, %29 : vector<64x64xf32>
    %c0_20 = arith.constant 0 : index
    %c0_21 = arith.constant 0 : index
    %31 = vector.load %arg12[%c0_20, %c0_21] : memref<64x64xf32, #tpu.memory_space<vmem>>, vector<64x64xf32>
    tpu.vector_store %arg12[%c0_20, %c0_21], %30 {strides = array<i32>} : memref<64x64xf32, #tpu.memory_space<vmem>>, vector<64x64xf32>,
    %c0_22 = arith.constant 0 : index
    %c0_23 = arith.constant 0 : index
    %32 = vector.load %arg10[%c0_22, %c0_23] : memref<64x1xf32, #tpu.memory_space<vmem>>, vector<64x1xf32>
    tpu.vector_store %arg10[%c0_22, %c0_23], %11 {strides = array<i32>} : memref<64x1xf32, #tpu.memory_space<vmem>>, vector<64x1xf32>,
    %c0_i32_24 = arith.constant 0 : i32
    %33 = arith.cmpi eq, %arg2, %c0_i32_24 : i32
    %34 = arith.extui %33 : i1 to i32
    %c0_i32_25 = arith.constant 0 : i32
    %35 = arith.cmpi ne, %34, %c0_i32_25 : i32
    scf.if %35 {
      %c0_26 = arith.constant 0 : index
      %c0_27 = arith.constant 0 : index
      %36 = vector.load %arg11[%c0_26, %c0_27] : memref<64x1xf32, #tpu.memory_space<vmem>>, vector<64x1xf32>
      %37 = tpu.reciprocal %36 {approx = true} : vector<64x1xf32> -> vector<64x1xf32>
      %c0_28 = arith.constant 0 : index
      %c0_29 = arith.constant 0 : index
      %38 = vector.load %arg12[%c0_28, %c0_29] : memref<64x64xf32, #tpu.memory_space<vmem>>, vector<64x64xf32>
      %39 = vector.broadcast %37 : vector<64x1xf32> to vector<64x64xf32>
      %40 = arith.mulf %38, %39 : vector<64x64xf32>
      %41 = arith.truncf %40 : vector<64x64xf32> to vector<64x64xbf16>
      %c0_30 = arith.constant 0 : index
      %c0_31 = arith.constant 0 : index
      %42 = vector.load %arg7[%c0_30, %c0_31] : memref<64x64xbf16, #tpu.memory_space<vmem>>, vector<64x64xbf16>
      %cst_32 = arith.constant dense<0.000000e+00> : vector<64x64xf32>
      %43 = tpu.matmul %41, %42, %cst_32 {dimension_numbers = #tpu.dot_dimension_numbers<[1], [0], [0], [1], [0, 0, 1, 1], [], []>} : vector<64x64xbf16>, vector<64x64xbf16>, vector<64x64xf32> -> vector<64x64xf32>
      %c0_33 = arith.constant 0 : index
      %c0_34 = arith.constant 0 : index
      %44 = vector.load %arg8[%c0_33, %c0_34] : memref<1x64xf32, #tpu.memory_space<vmem>>, vector<1x64xf32>
      %45 = vector.broadcast %44 : vector<1x64xf32> to vector<64x64xf32>
      %46 = arith.addf %43, %45 : vector<64x64xf32>
      %c0_35 = arith.constant 0 : index
      %c0_36 = arith.constant 0 : index
      %c0_37 = arith.constant 0 : index
      %47 = vector.load %arg6[%c0_35, %c0_36, %c0_37] : memref<1x64x64xf32, #tpu.memory_space<vmem>>, vector<1x64x64xf32>
      %48 = vector.shape_cast %47 : vector<1x64x64xf32> to vector<64x64xf32>
      %49 = arith.addf %48, %46 : vector<64x64xf32>
      %c0_38 = arith.constant 0 : index
      %c0_39 = arith.constant 0 : index
      %c0_40 = arith.constant 0 : index
      %50 = vector.load %arg9[%c0_38, %c0_39, %c0_40] : memref<1x64x64xf32, #tpu.memory_space<vmem>>, vector<1x64x64xf32>
      %51 = vector.shape_cast %50 : vector<1x64x64xf32> to vector<64x64xf32>
      %52 = vector.shape_cast %49 : vector<64x64xf32> to vector<1x64x64xf32>
      tpu.vector_store %arg9[%c0_38, %c0_39, %c0_40], %52 {strides = array<i32>} : memref<1x64x64xf32, #tpu.memory_space<vmem>>, vector<1x64x64xf32>,
    } else {
    }
    return
  }
  func.func @transform_0(%arg0: i32, %arg1: i32, %arg2: i32) -> (i32, i32, i32) {
    %c0_i32 = arith.constant 0 : i32
    %c0_i32_0 = arith.constant 0 : i32
    return %arg0, %arg1, %c0_i32 : i32, i32, i32
  }
  func.func @transform_1(%arg0: i32, %arg1: i32, %arg2: i32) -> (i32, i32, i32) {
    %c0_i32 = arith.constant 0 : i32
    %c0_i32_0 = arith.constant 0 : i32
    return %arg0, %arg2, %c0_i32 : i32, i32, i32
  }
  func.func @transform_2(%arg0: i32, %arg1: i32, %arg2: i32) -> (i32, i32, i32) {
    %c0_i32 = arith.constant 0 : i32
    %c0_i32_0 = arith.constant 0 : i32
    return %arg0, %arg2, %c0_i32 : i32, i32, i32
  }
  func.func @transform_3(%arg0: i32, %arg1: i32, %arg2: i32) -> (i32, i32, i32) {
    %c0_i32 = arith.constant 0 : i32
    %c0_i32_0 = arith.constant 0 : i32
    return %arg0, %arg1, %c0_i32 : i32, i32, i32
  }
  func.func @transform_4(%arg0: i32, %arg1: i32, %arg2: i32) -> (i32, i32) {
    %c0_i32 = arith.constant 0 : i32
    %c0_i32_0 = arith.constant 0 : i32
    %c0_i32_1 = arith.constant 0 : i32
    return %c0_i32, %c0_i32_0 : i32, i32
  }
  func.func @transform_5(%arg0: i32, %arg1: i32, %arg2: i32) -> (i32, i32) {
    %c0_i32 = arith.constant 0 : i32
    %c0_i32_0 = arith.constant 0 : i32
    %c0_i32_1 = arith.constant 0 : i32
    return %c0_i32, %c0_i32_0 : i32, i32
  }
  func.func @transform_6(%arg0: i32, %arg1: i32, %arg2: i32) -> (i32, i32, i32) {
    %c0_i32 = arith.constant 0 : i32
    %c0_i32_0 = arith.constant 0 : i32
    return %arg0, %arg1, %c0_i32 : i32, i32, i32
  }
}

</mosaic_0001>

<llo_original>
// kernel: attn_block.3
$region0: #{attn_block.3}
  #allocation0 [shape = 'u32[]', space=smem, size = 0x4, offset = 0x4, fixed_abs, tag = 'smem constant byte address 0x4 - core index']
  #allocation1 [shape = 'u32[144,128]{1,0:T(1,128)}', space=vmem, size = 0x12000, scoped, tag = 'internal scratch']
  %s0 = inlined_call_operand.hbm [shape: f32[2,64,64], index: 0, kind: input, shape index: {}]
  %s1 = inlined_call_operand.vmem [shape: f32[2,1,64], index: 1, kind: output, shape index: {0}]
  %s2 = inlined_call_operand.vmem [shape: f32[2,1,64], index: 2, kind: output, shape index: {1}]
  %3 = xla_tuple %s1, %s2
  %s4 = sld [smem:[#allocation0]]
  $region49: #{attn_block.3} parent=0
    _
  %s6 = ssub.s32 1, %s4
  %s7 = scalar_select 0, %s6, %s4
  $region1: #{attn_block.3} parent=0
    #allocation2 [shape = 'u8[65536]{0}', space=vmem, size = 0x10000, scoped, tag = 'input window, operand 0']
    #allocation3 [shape = 's32[2]{0}', space=sflag, size = 0x8, scoped, tag = 'scoped memory for attn_block.3']
    %8 = vsyncpa [#allocation3], 0
    %s9 = scalar_lea.sflag [#allocation3], 1
    %10 = vsyncpa %s9, 0
    loop: start=0, step=1, limit=4
    $region2: #{attn_block.3} parent=1 // loop_pre_header
      _
    $region3: #{attn_block.3} parent=1 // loop_header
      %s12 = sphi 0, %s16
      %p13 = scmp.ge.s32.totalorder %s12, 4
      %s22 = sphi 0, %s24
      %s25 = sphi 0, %s22
      %s26 = sphi 0, %s25
      %s42 = sphi 0, %s26
      %s48 = sphi 0, %s50
      %s51 = sphi 0, %s48
      %s52 = sphi 0, %s51
      %s68 = sphi 0, %s52
      %s74 = sphi 0, %s76
      %s77 = sphi 0, %s74
      %s78 = sphi 0, %s77
      %s94 = sphi 0, %s78
    $region4: #{attn_block.3} parent=1 // loop_header_branch
      %15 = sbr.rel (%p13) target = $region8
    $region5: #{attn_block.3} parent=1 // loop_body
      %s17 = ssub.s32 %s12, 1
      %s18 = ssub.s32 %s12, 2
      %s19 = sadd.s32 %s12, 1
      %s20 = ssub.s32 %s12, %s19
      %p21 = scmp.eq.s32.totalorder %s20, 0
      %s23 = sadd.s32 %s22, 1
      %s24 = scalar_select %p21, %s22, %s23
      %p27 = pneg %p21
      %p28 = scmp.eq.s32.totalorder %s12, 1
      %p29 = por %p27, %p28
      %p30 = scmp.ne.s32.totalorder %s22, %s25
      %p31 = scmp.eq.s32.totalorder %s12, 0
      %p32 = por %p30, %p31
      %p33 = scmp.ne.s32.totalorder %s22, %s25
      %p34 = scmp.eq.s32.totalorder %s17, 1
      %p35 = por %p33, %p34
      %p36 = scmp.ne.s32.totalorder %s25, %s26
      %p37 = scmp.eq.s32.totalorder %s17, 0
      %p38 = por %p36, %p37
      %p39 = scmp.ne.s32.totalorder %s25, %s26
      %p40 = scmp.eq.s32.totalorder %s18, 1
      %p41 = por %p39, %p40
      %p43 = scmp.ne.s32.totalorder %s26, %s42
      %p44 = scmp.eq.s32.totalorder %s18, 0
      %p45 = por %p43, %p44
      %s46 = ssub.s32 %s12, %s19
      %p47 = scmp.eq.s32.totalorder %s46, 0
      %s49 = sadd.s32 %s48, 1
      %s50 = scalar_select %p47, %s48, %s49
      %p53 = pneg %p47
      %p54 = scmp.eq.s32.totalorder %s12, 1
      %p55 = por %p53, %p54
      %p56 = scmp.ne.s32.totalorder %s48, %s51
      %p57 = scmp.eq.s32.totalorder %s12, 0
      %p58 = por %p56, %p57
      %p59 = scmp.ne.s32.totalorder %s48, %s51
      %p60 = scmp.eq.s32.totalorder %s17, 1
      %p61 = por %p59, %p60
      %p62 = scmp.ne.s32.totalorder %s51, %s52
      %p63 = scmp.eq.s32.totalorder %s17, 0
      %p64 = por %p62, %p63
      %p65 = scmp.ne.s32.totalorder %s51, %s52
      %p66 = scmp.eq.s32.totalorder %s18, 1
      %p67 = por %p65, %p66
      %p69 = scmp.ne.s32.totalorder %s52, %s68
      %p70 = scmp.eq.s32.totalorder %s18, 0
      %p71 = por %p69, %p70
      %s72 = ssub.s32 %s12, %s19
      %p73 = scmp.eq.s32.totalorder %s72, 0
      %s75 = sadd.s32 %s74, 1
      %s76 = scalar_select %p73, %s74, %s75
      %p79 = pneg %p73
      %p80 = scmp.eq.s32.totalorder %s12, 1
      %p81 = por %p79, %p80
      %p82 = scmp.ne.s32.totalorder %s74, %s77
      %p83 = scmp.eq.s32.totalorder %s12, 0
      %p84 = por %p82, %p83
      %p85 = scmp.ne.s32.totalorder %s74, %s77
      %p86 = scmp.eq.s32.totalorder %s17, 1
      %p87 = por %p85, %p86
      %p88 = scmp.ne.s32.totalorder %s77, %s78
      %p89 = scmp.eq.s32.totalorder %s17, 0
      %p90 = por %p88, %p89
      %p91 = scmp.ne.s32.totalorder %s77, %s78
      %p92 = scmp.eq.s32.totalorder %s18, 1
      %p93 = por %p91, %p92
      %p95 = scmp.ne.s32.totalorder %s78, %s94
      %p96 = scmp.eq.s32.totalorder %s18, 0
      %p97 = por %p95, %p96
      %p98 = scmp.le.s32.totalorder 1, %s12
      %p99 = scmp.lt.s32.totalorder %s12, 3
      %p100 = pnand %p98, %p99
      %p101 = pneg %p100
      // Predicated region
      $region9: #{attn_block.3} parent=5 // pred_check
        _
      $region10: #{attn_block.3} parent=5 // pred_check_branch
        %103 = sbr.rel (%p100) target = $region12
      $region11: #{attn_block.3} parent=5 // pred_region
        %s104 = ssub.s32 %s12, 1
      $region12: #{attn_block.3} parent=5 // pred_fallthru
        _
      %p105 = scmp.lt.s32.totalorder %s12, 2
      // Predicated region
      $region13: #{attn_block.3} parent=5 // pred_check
        %p106 = pneg %p105
      $region14: #{attn_block.3} parent=5 // pred_check_branch
        %108 = sbr.rel (%p106) target = $region16
      $region15: #{attn_block.3} parent=5 // pred_region
        // Predicated region
        $region17: #{attn_block.3} parent=15 // pred_check
          %p109 = pneg %p32
        $region18: #{attn_block.3} parent=15 // pred_check_branch
          %111 = sbr.rel (%p109) target = $region20
        $region19: #{attn_block.3} parent=15 // pred_region
          %s112 = sand.u32 %s22, 1
          %s113 = scalar_lea.sflag [#allocation3], %s112
          %s114 = sand.u32 %s22, 1
          %s115 = smul.addr %s114, 64
          %s116 = scalar_lea.vmem [#allocation2], %s115
          %s118 = ssub.s32 1024, 1024
          %119 = vsyncadd %s113, %s118
          %s120 = smul.addr %s12, 8
          %s121 = smul.addr %s120, 128
          %s122 = scalar_lea.hbm %s0, %s121
          %s123 = sshll.u32 %s116, 4
          %s124 = int_to_ptr.vmem [resolvable:$true] %s123
          %129 = dma.hbm_to_vmem [thread:$0]  %s122, 1024, %s124, %s113, 128, 128, 8
        $region20: #{attn_block.3} parent=15 // pred_fallthru
          _
      $region16: #{attn_block.3} parent=5 // pred_fallthru
        _
      %p130 = scmp.le.s32.totalorder 1, %s12
      %p131 = scmp.lt.s32.totalorder %s12, 3
      %p132 = pnand %p130, %p131
      %p133 = pneg %p132
      // Predicated region
      $region21: #{attn_block.3} parent=5 // pred_check
        _
      $region22: #{attn_block.3} parent=5 // pred_check_branch
        %135 = sbr.rel (%p132) target = $region24
      $region23: #{attn_block.3} parent=5 // pred_region
        %s136 = ssub.s32 %s12, 1
        %s137 = sand.u32 %s25, 1
        %s138 = scalar_lea.sflag [#allocation3], %s137
        %s139 = sand.u32 %s25, 1
        %s140 = smul.addr %s139, 64
        %s141 = scalar_lea.vmem [#allocation2], %s140
        // Predicated region
        $region25: #{attn_block.3} parent=23 // pred_check
          %p142 = pneg %p38
        $region26: #{attn_block.3} parent=23 // pred_check_branch
          %144 = sbr.rel (%p142) target = $region28
        $region27: #{attn_block.3} parent=23 // pred_region
          %145 = dma.done %s138, 1024
        $region28: #{attn_block.3} parent=23 // pred_fallthru
          _
        %s146 = sand.u32 %s25, 1
        %s147 = scalar_lea.sflag [#allocation3], %s146
        %s148 = sand.u32 %s25, 1
        %s149 = smul.addr %s148, 64
        %s150 = scalar_lea.vmem [#allocation2], %s149
        %p151 = pneg %p38
        %p152 = pneg %p35
        %p153 = pneg %p64
        %p154 = pneg %p61
        %p155 = scmp.lt.s32.totalorder %s17, 1
        %s156 = scalar_select %p155, %s17, 1
        %s157 = scalar_lea.vmem %s1, %s156
        %p158 = pneg %p90
        %p159 = pneg %p87
        %p160 = scmp.lt.s32.totalorder %s17, 1
        %s161 = scalar_select %p160, %s17, 1
        %s162 = scalar_lea.vmem %s2, %s161
        %p163 = scmp.lt.s32.totalorder %s17, 1
        %s164 = scalar_select %p163, %s17, 1
        %s165 = scalar_lea.vmem %s1, %s164
        %p166 = scmp.lt.s32.totalorder %s17, 1
        %s167 = scalar_select %p166, %s17, 1
        %s168 = scalar_lea.vmem %s2, %s167
        %v169 = vld [vmem:[%s141] sm:$0xff]
        %v170 = vld [vmem:[%s141 + $0x8] sm:$0xff]
        %v171 = vld [vmem:[%s141 + $0x10] sm:$0xff]
        %v172 = vld [vmem:[%s141 + $0x18] sm:$0xff]
        %v173 = vld [vmem:[%s141 + $0x20] sm:$0xff]
        %v174 = vld [vmem:[%s141 + $0x28] sm:$0xff]
        %v175 = vld [vmem:[%s141 + $0x30] sm:$0xff]
        %v176 = vld [vmem:[%s141 + $0x38] sm:$0xff]
        %vm177 = vcmask 523264
        %v178 = vsel %vm177, %v169, 0.0
        %v179 = vsel %vm177, %v170, 0.0
        %v180 = vadd.f32 %v178, %v179
        %v181 = vsel %vm177, %v171, 0.0
        %v182 = vadd.f32 %v180, %v181
        %v183 = vsel %vm177, %v172, 0.0
        %v184 = vadd.f32 %v182, %v183
        %v185 = vsel %vm177, %v173, 0.0
        %v186 = vadd.f32 %v184, %v185
        %v187 = vsel %vm177, %v174, 0.0
        %v188 = vadd.f32 %v186, %v187
        %v189 = vsel %vm177, %v175, 0.0
        %v190 = vadd.f32 %v188, %v189
        %v191 = vsel %vm177, %v176, 0.0
        %v192 = vadd.f32 %v190, %v191
        %v193 = vrot.slane %v192, 4
        %v194 = vadd.f32 %v192, %v193
        %v195 = vrot.slane %v194, 2
        %v196 = vadd.f32 %v194, %v195
        %v197 = vrot.slane %v196, 1
        %v198 = vadd.f32 %v196, %v197
        %vm199 = vcmask 516096
        %200 = vst.msk [vmem:[%s165] sm:$0x1] %vm199, %v198
        %v201 = vmul.f32 %v169, %v169
        %v202 = vmul.f32 %v170, %v170
        %v203 = vmul.f32 %v171, %v171
        %v204 = vmul.f32 %v172, %v172
        %v205 = vmul.f32 %v173, %v173
        %v206 = vmul.f32 %v174, %v174
        %v207 = vmul.f32 %v175, %v175
        %v208 = vmul.f32 %v176, %v176
        %v209 = vsel %vm177, %v201, 0.0
        %v210 = vsel %vm177, %v202, 0.0
        %v211 = vadd.f32 %v209, %v210
        %v212 = vsel %vm177, %v203, 0.0
        %v213 = vadd.f32 %v211, %v212
        %v214 = vsel %vm177, %v204, 0.0
        %v215 = vadd.f32 %v213, %v214
        %v216 = vsel %vm177, %v205, 0.0
        %v217 = vadd.f32 %v215, %v216
        %v218 = vsel %vm177, %v206, 0.0
        %v219 = vadd.f32 %v217, %v218
        %v220 = vsel %vm177, %v207, 0.0
        %v221 = vadd.f32 %v219, %v220
        %v222 = vsel %vm177, %v208, 0.0
        %v223 = vadd.f32 %v221, %v222
        %v224 = vrot.slane %v223, 4
        %v225 = vadd.f32 %v223, %v224
        %v226 = vrot.slane %v225, 2
        %v227 = vadd.f32 %v225, %v226
        %v228 = vrot.slane %v227, 1
        %v229 = vadd.f32 %v227, %v228
        %230 = vst.msk [vmem:[%s168] sm:$0x1] %vm199, %v229
        %p231 = scmp.lt.s32.totalorder %s17, 1
        %s232 = scalar_select %p231, %s17, 1
        %s233 = scalar_lea.vmem %s1, %s232
        %p234 = scmp.lt.s32.totalorder %s17, 1
        %s235 = scalar_select %p234, %s17, 1
        %s236 = scalar_lea.vmem %s2, %s235
        // Predicated region
        $region29: #{attn_block.3} parent=23 // pred_check
          %p237 = pneg %p61
        $region30: #{attn_block.3} parent=23 // pred_check_branch
          %239 = sbr.rel (%p237) target = $region32
        $region31: #{attn_block.3} parent=23 // pred_region
          _
        $region32: #{attn_block.3} parent=23 // pred_fallthru
          _
        // Predicated region
        $region33: #{attn_block.3} parent=23 // pred_check
          %p240 = pneg %p87
        $region34: #{attn_block.3} parent=23 // pred_check_branch
          %242 = sbr.rel (%p240) target = $region36
        $region35: #{attn_block.3} parent=23 // pred_region
          _
        $region36: #{attn_block.3} parent=23 // pred_fallthru
          _
      $region24: #{attn_block.3} parent=5 // pred_fallthru
        _
      %p243 = scmp.le.s32.totalorder 2, %s12
      // Predicated region
      $region37: #{attn_block.3} parent=5 // pred_check
        %p244 = pneg %p243
      $region38: #{attn_block.3} parent=5 // pred_check_branch
        %246 = sbr.rel (%p244) target = $region40
      $region39: #{attn_block.3} parent=5 // pred_region
        %s247 = ssub.s32 %s12, 2
        // Predicated region
        $region41: #{attn_block.3} parent=39 // pred_check
          %p248 = pneg %p67
        $region42: #{attn_block.3} parent=39 // pred_check_branch
          %250 = sbr.rel (%p248) target = $region44
        $region43: #{attn_block.3} parent=39 // pred_region
          %p251 = scmp.lt.s32.totalorder %s18, 1
          %s252 = scalar_select %p251, %s18, 1
          %s253 = scalar_lea.vmem %s1, %s252
        $region44: #{attn_block.3} parent=39 // pred_fallthru
          _
        // Predicated region
        $region45: #{attn_block.3} parent=39 // pred_check
          %p254 = pneg %p93
        $region46: #{attn_block.3} parent=39 // pred_check_branch
          %256 = sbr.rel (%p254) target = $region48
        $region47: #{attn_block.3} parent=39 // pred_region
          %p257 = scmp.lt.s32.totalorder %s18, 1
          %s258 = scalar_select %p257, %s18, 1
          %s259 = scalar_lea.vmem %s2, %s258
        $region48: #{attn_block.3} parent=39 // pred_fallthru
          _
      $region40: #{attn_block.3} parent=5 // pred_fallthru
        _
    $region6: #{attn_block.3} parent=1 // loop_footer
      %s16 = sadd.s32 1, %s12
    $region7: #{attn_block.3} parent=1 // loop_footer_branch
      %11 = sbr.rel target = $region3
    $region8: #{attn_block.3} parent=1 // loop_exit
      _
    %260 = vsyncpa [#allocation3], 1
    %s261 = scalar_lea.sflag [#allocation3], 1
    %262 = vsyncpa %s261, 1

// kernel: attn_block.4
$region0: #{attn_block.4}
  #allocation0 [shape = 'u32[]', space=smem, size = 0x4, offset = 0x4, fixed_abs, tag = 'smem constant byte address 0x4 - core index']
  #allocation1 [shape = 'u32[144,128]{1,0:T(1,128)}', space=vmem, size = 0x12000, scoped, tag = 'internal scratch']
  %s0 = inlined_call_operand.vmem [shape: f32[2,64,64], index: 0, kind: input, shape index: {}]
  %s1 = inlined_call_operand.vmem [shape: f32[2,1,64], index: 1, kind: input, shape index: {}]
  %s2 = inlined_call_operand.vmem [shape: f32[2,1,64], index: 2, kind: input, shape index: {}]
  %s3 = inlined_call_operand.vmem [shape: bf16[64,64], index: 3, kind: input, shape index: {}]
  %s4 = inlined_call_operand.vmem [shape: f32[1,64], index: 4, kind: input, shape index: {}]
  %s5 = inlined_call_operand.vmem [shape: bf16[64,64], index: 5, kind: input, shape index: {}]
  %s6 = inlined_call_operand.vmem [shape: f32[1,64], index: 6, kind: input, shape index: {}]
  %s7 = inlined_call_operand.vmem [shape: bf16[64,64], index: 7, kind: input, shape index: {}]
  %s8 = inlined_call_operand.vmem [shape: f32[1,64], index: 8, kind: input, shape index: {}]
  %s9 = inlined_call_operand.vmem [shape: bf16[2,64,64], index: 9, kind: output, shape index: {0}]
  %s10 = inlined_call_operand.vmem [shape: bf16[2,64,64], index: 10, kind: output, shape index: {1}]
  %s11 = inlined_call_operand.vmem [shape: bf16[2,64,64], index: 11, kind: output, shape index: {2}]
  %12 = xla_tuple %s9, %s10, %s11
  %s13 = sld [smem:[#allocation0]]
  $region85: #{attn_block.4} parent=0
    _
  %s15 = ssub.s32 1, %s13
  %s16 = scalar_select 0, %s15, %s13
  loop: start=0, step=1, limit=4
  $region2: #{attn_block.4} parent=0 // loop_pre_header
    _
  $region3: #{attn_block.4} parent=0 // loop_header
    %s18 = sphi 0, %s22
    %p19 = scmp.ge.s32.totalorder %s18, 4
    %s25 = sphi 0, %s37
    %s26 = sphi 0, %s33
    %s27 = sphi 0, %s25
    %s28 = sphi 0, %s26
    %s29 = sphi 0, %s27
    %s30 = sphi 0, %s28
    %s42 = sphi 0, %s44
    %s45 = sphi 0, %s42
    %s46 = sphi 0, %s45
    %s62 = sphi 0, %s46
    %s68 = sphi 0, %s70
    %s71 = sphi 0, %s68
    %s72 = sphi 0, %s71
    %s88 = sphi 0, %s72
    %s94 = sphi 0, %s96
    %s97 = sphi 0, %s94
    %s98 = sphi 0, %s97
    %s114 = sphi 0, %s98
    %s118 = sphi 0, %s118
    %s120 = sphi 0, %s118
    %s121 = sphi 0, %s120
    %s135 = sphi 0, %s121
    %s139 = sphi 0, %s139
    %s141 = sphi 0, %s139
    %s142 = sphi 0, %s141
    %s156 = sphi 0, %s142
    %s160 = sphi 0, %s160
    %s162 = sphi 0, %s160
    %s163 = sphi 0, %s162
    %s177 = sphi 0, %s163
    %s181 = sphi 0, %s181
    %s183 = sphi 0, %s181
    %s184 = sphi 0, %s183
    %s198 = sphi 0, %s184
    %s202 = sphi 0, %s202
    %s204 = sphi 0, %s202
    %s205 = sphi 0, %s204
    %s219 = sphi 0, %s205
    %s223 = sphi 0, %s223
    %s225 = sphi 0, %s223
    %s226 = sphi 0, %s225
    %s240 = sphi 0, %s226
    %s248 = sphi 0, %s250
    %s251 = sphi 0, %s248
    %s252 = sphi 0, %s251
    %s268 = sphi 0, %s252
    %s276 = sphi 0, %s278
    %s279 = sphi 0, %s276
    %s280 = sphi 0, %s279
    %s296 = sphi 0, %s280
    %s304 = sphi 0, %s306
    %s307 = sphi 0, %s304
    %s308 = sphi 0, %s307
    %s324 = sphi 0, %s308
  $region4: #{attn_block.4} parent=0 // loop_header_branch
    %21 = sbr.rel (%p19) target = $region8
  $region5: #{attn_block.4} parent=0 // loop_body
    %s23 = ssub.s32 %s18, 1
    %s24 = ssub.s32 %s18, 2
    %s31 = sadd.s32 1, %s26
    %p32 = scmp.ge.s32.totalorder %s31, 1
    %s33 = scalar_select %p32, 0, %s31
    %s34 = sadd.s32 1, %s25
    %s35 = scalar_select %p32, %s34, %s25
    %p36 = scmp.ge.s32.totalorder %s35, 2
    %s37 = scalar_select %p36, 0, %s35
    %s38 = ssub.s32 %s25, %s37
    %s39 = ssub.s32 %s26, %s33
    %s40 = sor.u32 %s38, %s39
    %p41 = scmp.eq.s32.totalorder %s40, 0
    %s43 = sadd.s32 %s42, 1
    %s44 = scalar_select %p41, %s42, %s43
    %p47 = pneg %p41
    %p48 = scmp.eq.s32.totalorder %s18, 1
    %p49 = por %p47, %p48
    %p50 = scmp.ne.s32.totalorder %s42, %s45
    %p51 = scmp.eq.s32.totalorder %s18, 0
    %p52 = por %p50, %p51
    %p53 = scmp.ne.s32.totalorder %s42, %s45
    %p54 = scmp.eq.s32.totalorder %s23, 1
    %p55 = por %p53, %p54
    %p56 = scmp.ne.s32.totalorder %s45, %s46
    %p57 = scmp.eq.s32.totalorder %s23, 0
    %p58 = por %p56, %p57
    %p59 = scmp.ne.s32.totalorder %s45, %s46
    %p60 = scmp.eq.s32.totalorder %s24, 1
    %p61 = por %p59, %p60
    %p63 = scmp.ne.s32.totalorder %s46, %s62
    %p64 = scmp.eq.s32.totalorder %s24, 0
    %p65 = por %p63, %p64
    %s66 = ssub.s32 %s25, %s37
    %p67 = scmp.eq.s32.totalorder %s66, 0
    %s69 = sadd.s32 %s68, 1
    %s70 = scalar_select %p67, %s68, %s69
    %p73 = pneg %p67
    %p74 = scmp.eq.s32.totalorder %s18, 1
    %p75 = por %p73, %p74
    %p76 = scmp.ne.s32.totalorder %s68, %s71
    %p77 = scmp.eq.s32.totalorder %s18, 0
    %p78 = por %p76, %p77
    %p79 = scmp.ne.s32.totalorder %s68, %s71
    %p80 = scmp.eq.s32.totalorder %s23, 1
    %p81 = por %p79, %p80
    %p82 = scmp.ne.s32.totalorder %s71, %s72
    %p83 = scmp.eq.s32.totalorder %s23, 0
    %p84 = por %p82, %p83
    %p85 = scmp.ne.s32.totalorder %s71, %s72
    %p86 = scmp.eq.s32.totalorder %s24, 1
    %p87 = por %p85, %p86
    %p89 = scmp.ne.s32.totalorder %s72, %s88
    %p90 = scmp.eq.s32.totalorder %s24, 0
    %p91 = por %p89, %p90
    %s92 = ssub.s32 %s25, %s37
    %p93 = scmp.eq.s32.totalorder %s92, 0
    %s95 = sadd.s32 %s94, 1
    %s96 = scalar_select %p93, %s94, %s95
    %p99 = pneg %p93
    %p100 = scmp.eq.s32.totalorder %s18, 1
    %p101 = por %p99, %p100
    %p102 = scmp.ne.s32.totalorder %s94, %s97
    %p103 = scmp.eq.s32.totalorder %s18, 0
    %p104 = por %p102, %p103
    %p105 = scmp.ne.s32.totalorder %s94, %s97
    %p106 = scmp.eq.s32.totalorder %s23, 1
    %p107 = por %p105, %p106
    %p108 = scmp.ne.s32.totalorder %s97, %s98
    %p109 = scmp.eq.s32.totalorder %s23, 0
    %p110 = por %p108, %p109
    %p111 = scmp.ne.s32.totalorder %s97, %s98
    %p112 = scmp.eq.s32.totalorder %s24, 1
    %p113 = por %p111, %p112
    %p115 = scmp.ne.s32.totalorder %s98, %s114
    %p116 = scmp.eq.s32.totalorder %s24, 0
    %p117 = por %p115, %p116
    %s119 = sadd.s32 %s118, 1
    %p122 = scmp.eq.s32.totalorder %s18, 1
    %p123 = scmp.ne.s32.totalorder %s118, %s120
    %p124 = scmp.eq.s32.totalorder %s18, 0
    %p125 = por %p123, %p124
    %p126 = scmp.ne.s32.totalorder %s118, %s120
    %p127 = scmp.eq.s32.totalorder %s23, 1
    %p128 = por %p126, %p127
    %p129 = scmp.ne.s32.totalorder %s120, %s121
    %p130 = scmp.eq.s32.totalorder %s23, 0
    %p131 = por %p129, %p130
    %p132 = scmp.ne.s32.totalorder %s120, %s121
    %p133 = scmp.eq.s32.totalorder %s24, 1
    %p134 = por %p132, %p133
    %p136 = scmp.ne.s32.totalorder %s121, %s135
    %p137 = scmp.eq.s32.totalorder %s24, 0
    %p138 = por %p136, %p137
    %s140 = sadd.s32 %s139, 1
    %p143 = scmp.eq.s32.totalorder %s18, 1
    %p144 = scmp.ne.s32.totalorder %s139, %s141
    %p145 = scmp.eq.s32.totalorder %s18, 0
    %p146 = por %p144, %p145
    %p147 = scmp.ne.s32.totalorder %s139, %s141
    %p148 = scmp.eq.s32.totalorder %s23, 1
    %p149 = por %p147, %p148
    %p150 = scmp.ne.s32.totalorder %s141, %s142
    %p151 = scmp.eq.s32.totalorder %s23, 0
    %p152 = por %p150, %p151
    %p153 = scmp.ne.s32.totalorder %s141, %s142
    %p154 = scmp.eq.s32.totalorder %s24, 1
    %p155 = por %p153, %p154
    %p157 = scmp.ne.s32.totalorder %s142, %s156
    %p158 = scmp.eq.s32.totalorder %s24, 0
    %p159 = por %p157, %p158
    %s161 = sadd.s32 %s160, 1
    %p164 = scmp.eq.s32.totalorder %s18, 1
    %p165 = scmp.ne.s32.totalorder %s160, %s162
    %p166 = scmp.eq.s32.totalorder %s18, 0
    %p167 = por %p165, %p166
    %p168 = scmp.ne.s32.totalorder %s160, %s162
    %p169 = scmp.eq.s32.totalorder %s23, 1
    %p170 = por %p168, %p169
    %p171 = scmp.ne.s32.totalorder %s162, %s163
    %p172 = scmp.eq.s32.totalorder %s23, 0
    %p173 = por %p171, %p172
    %p174 = scmp.ne.s32.totalorder %s162, %s163
    %p175 = scmp.eq.s32.totalorder %s24, 1
    %p176 = por %p174, %p175
    %p178 = scmp.ne.s32.totalorder %s163, %s177
    %p179 = scmp.eq.s32.totalorder %s24, 0
    %p180 = por %p178, %p179
    %s182 = sadd.s32 %s181, 1
    %p185 = scmp.eq.s32.totalorder %s18, 1
    %p186 = scmp.ne.s32.totalorder %s181, %s183
    %p187 = scmp.eq.s32.totalorder %s18, 0
    %p188 = por %p186, %p187
    %p189 = scmp.ne.s32.totalorder %s181, %s183
    %p190 = scmp.eq.s32.totalorder %s23, 1
    %p191 = por %p189, %p190
    %p192 = scmp.ne.s32.totalorder %s183, %s184
    %p193 = scmp.eq.s32.totalorder %s23, 0
    %p194 = por %p192, %p193
    %p195 = scmp.ne.s32.totalorder %s183, %s184
    %p196 = scmp.eq.s32.totalorder %s24, 1
    %p197 = por %p195, %p196
    %p199 = scmp.ne.s32.totalorder %s184, %s198
    %p200 = scmp.eq.s32.totalorder %s24, 0
    %p201 = por %p199, %p200
    %s203 = sadd.s32 %s202, 1
    %p206 = scmp.eq.s32.totalorder %s18, 1
    %p207 = scmp.ne.s32.totalorder %s202, %s204
    %p208 = scmp.eq.s32.totalorder %s18, 0
    %p209 = por %p207, %p208
    %p210 = scmp.ne.s32.totalorder %s202, %s204
    %p211 = scmp.eq.s32.totalorder %s23, 1
    %p212 = por %p210, %p211
    %p213 = scmp.ne.s32.totalorder %s204, %s205
    %p214 = scmp.eq.s32.totalorder %s23, 0
    %p215 = por %p213, %p214
    %p216 = scmp.ne.s32.totalorder %s204, %s205
    %p217 = scmp.eq.s32.totalorder %s24, 1
    %p218 = por %p216, %p217
    %p220 = scmp.ne.s32.totalorder %s205, %s219
    %p221 = scmp.eq.s32.totalorder %s24, 0
    %p222 = por %p220, %p221
    %s224 = sadd.s32 %s223, 1
    %p227 = scmp.eq.s32.totalorder %s18, 1
    %p228 = scmp.ne.s32.totalorder %s223, %s225
    %p229 = scmp.eq.s32.totalorder %s18, 0
    %p230 = por %p228, %p229
    %p231 = scmp.ne.s32.totalorder %s223, %s225
    %p232 = scmp.eq.s32.totalorder %s23, 1
    %p233 = por %p231, %p232
    %p234 = scmp.ne.s32.totalorder %s225, %s226
    %p235 = scmp.eq.s32.totalorder %s23, 0
    %p236 = por %p234, %p235
    %p237 = scmp.ne.s32.totalorder %s225, %s226
    %p238 = scmp.eq.s32.totalorder %s24, 1
    %p239 = por %p237, %p238
    %p241 = scmp.ne.s32.totalorder %s226, %s240
    %p242 = scmp.eq.s32.totalorder %s24, 0
    %p243 = por %p241, %p242
    %s244 = ssub.s32 %s25, %s37
    %s245 = ssub.s32 %s26, %s33
    %s246 = sor.u32 %s244, %s245
    %p247 = scmp.eq.s32.totalorder %s246, 0
    %s249 = sadd.s32 %s248, 1
    %s250 = scalar_select %p247, %s248, %s249
    %p253 = pneg %p247
    %p254 = scmp.eq.s32.totalorder %s18, 1
    %p255 = por %p253, %p254
    %p256 = scmp.ne.s32.totalorder %s248, %s251
    %p257 = scmp.eq.s32.totalorder %s18, 0
    %p258 = por %p256, %p257
    %p259 = scmp.ne.s32.totalorder %s248, %s251
    %p260 = scmp.eq.s32.totalorder %s23, 1
    %p261 = por %p259, %p260
    %p262 = scmp.ne.s32.totalorder %s251, %s252
    %p263 = scmp.eq.s32.totalorder %s23, 0
    %p264 = por %p262, %p263
    %p265 = scmp.ne.s32.totalorder %s251, %s252
    %p266 = scmp.eq.s32.totalorder %s24, 1
    %p267 = por %p265, %p266
    %p269 = scmp.ne.s32.totalorder %s252, %s268
    %p270 = scmp.eq.s32.totalorder %s24, 0
    %p271 = por %p269, %p270
    %s272 = ssub.s32 %s25, %s37
    %s273 = ssub.s32 %s26, %s33
    %s274 = sor.u32 %s272, %s273
    %p275 = scmp.eq.s32.totalorder %s274, 0
    %s277 = sadd.s32 %s276, 1
    %s278 = scalar_select %p275, %s276, %s277
    %p281 = pneg %p275
    %p282 = scmp.eq.s32.totalorder %s18, 1
    %p283 = por %p281, %p282
    %p284 = scmp.ne.s32.totalorder %s276, %s279
    %p285 = scmp.eq.s32.totalorder %s18, 0
    %p286 = por %p284, %p285
    %p287 = scmp.ne.s32.totalorder %s276, %s279
    %p288 = scmp.eq.s32.totalorder %s23, 1
    %p289 = por %p287, %p288
    %p290 = scmp.ne.s32.totalorder %s279, %s280
    %p291 = scmp.eq.s32.totalorder %s23, 0
    %p292 = por %p290, %p291
    %p293 = scmp.ne.s32.totalorder %s279, %s280
    %p294 = scmp.eq.s32.totalorder %s24, 1
    %p295 = por %p293, %p294
    %p297 = scmp.ne.s32.totalorder %s280, %s296
    %p298 = scmp.eq.s32.totalorder %s24, 0
    %p299 = por %p297, %p298
    %s300 = ssub.s32 %s25, %s37
    %s301 = ssub.s32 %s26, %s33
    %s302 = sor.u32 %s300, %s301
    %p303 = scmp.eq.s32.totalorder %s302, 0
    %s305 = sadd.s32 %s304, 1
    %s306 = scalar_select %p303, %s304, %s305
    %p309 = pneg %p303
    %p310 = scmp.eq.s32.totalorder %s18, 1
    %p311 = por %p309, %p310
    %p312 = scmp.ne.s32.totalorder %s304, %s307
    %p313 = scmp.eq.s32.totalorder %s18, 0
    %p314 = por %p312, %p313
    %p315 = scmp.ne.s32.totalorder %s304, %s307
    %p316 = scmp.eq.s32.totalorder %s23, 1
    %p317 = por %p315, %p316
    %p318 = scmp.ne.s32.totalorder %s307, %s308
    %p319 = scmp.eq.s32.totalorder %s23, 0
    %p320 = por %p318, %p319
    %p321 = scmp.ne.s32.totalorder %s307, %s308
    %p322 = scmp.eq.s32.totalorder %s24, 1
    %p323 = por %p321, %p322
    %p325 = scmp.ne.s32.totalorder %s308, %s324
    %p326 = scmp.eq.s32.totalorder %s24, 0
    %p327 = por %p325, %p326
    %p328 = scmp.le.s32.totalorder 1, %s18
    %p329 = scmp.lt.s32.totalorder %s18, 3
    %p330 = pnand %p328, %p329
    %p331 = pneg %p330
    // Predicated region
    $region9: #{attn_block.4} parent=5 // pred_check
      _
    $region10: #{attn_block.4} parent=5 // pred_check_branch
      %333 = sbr.rel (%p330) target = $region12
    $region11: #{attn_block.4} parent=5 // pred_region
      %s334 = ssub.s32 %s18, 1
      // Predicated region
      $region13: #{attn_block.4} parent=11 // pred_check
        %p335 = pneg %p131
      $region14: #{attn_block.4} parent=11 // pred_check_branch
        %337 = sbr.rel (%p335) target = $region16
      $region15: #{attn_block.4} parent=11 // pred_region
        _
      $region16: #{attn_block.4} parent=11 // pred_fallthru
        _
      // Predicated region
      $region17: #{attn_block.4} parent=11 // pred_check
        %p338 = pneg %p152
      $region18: #{attn_block.4} parent=11 // pred_check_branch
        %340 = sbr.rel (%p338) target = $region20
      $region19: #{attn_block.4} parent=11 // pred_region
        _
      $region20: #{attn_block.4} parent=11 // pred_fallthru
        _
      // Predicated region
      $region21: #{attn_block.4} parent=11 // pred_check
        %p341 = pneg %p173
      $region22: #{attn_block.4} parent=11 // pred_check_branch
        %343 = sbr.rel (%p341) target = $region24
      $region23: #{attn_block.4} parent=11 // pred_region
        _
      $region24: #{attn_block.4} parent=11 // pred_fallthru
        _
      // Predicated region
      $region25: #{attn_block.4} parent=11 // pred_check
        %p344 = pneg %p194
      $region26: #{attn_block.4} parent=11 // pred_check_branch
        %346 = sbr.rel (%p344) target = $region28
      $region27: #{attn_block.4} parent=11 // pred_region
        _
      $region28: #{attn_block.4} parent=11 // pred_fallthru
        _
      // Predicated region
      $region29: #{attn_block.4} parent=11 // pred_check
        %p347 = pneg %p215
      $region30: #{attn_block.4} parent=11 // pred_check_branch
        %349 = sbr.rel (%p347) target = $region32
      $region31: #{attn_block.4} parent=11 // pred_region
        _
      $region32: #{attn_block.4} parent=11 // pred_fallthru
        _
      // Predicated region
      $region33: #{attn_block.4} parent=11 // pred_check
        %p350 = pneg %p236
      $region34: #{attn_block.4} parent=11 // pred_check_branch
        %352 = sbr.rel (%p350) target = $region36
      $region35: #{attn_block.4} parent=11 // pred_region
        _
      $region36: #{attn_block.4} parent=11 // pred_fallthru
        _
    $region12: #{attn_block.4} parent=5 // pred_fallthru
      _
    %p353 = scmp.lt.s32.totalorder %s18, 2
    // Predicated region
    $region37: #{attn_block.4} parent=5 // pred_check
      %p354 = pneg %p353
    $region38: #{attn_block.4} parent=5 // pred_check_branch
      %356 = sbr.rel (%p354) target = $region40
    $region39: #{attn_block.4} parent=5 // pred_region
      // Predicated region
      $region41: #{attn_block.4} parent=39 // pred_check
        %p357 = pneg %p52
      $region42: #{attn_block.4} parent=39 // pred_check_branch
        %359 = sbr.rel (%p357) target = $region44
      $region43: #{attn_block.4} parent=39 // pred_region
        %s360 = smul.u32 8, %s26
        %p361 = scmp.lt.s32.totalorder %s25, 1
        %s362 = scalar_select %p361, %s25, 1
        %p363 = scmp.lt.s32.totalorder %s360, 7
        %s364 = scalar_select %p363, %s360, 7
        %s365 = smul.addr %s362, 8
        %s366 = sadd.s32 %s364, %s365
        %s367 = smul.addr %s366, 8
        %s368 = scalar_lea.vmem %s0, %s367
        %s369 = smul.u32 8, %s26
      $region44: #{attn_block.4} parent=39 // pred_fallthru
        _
      // Predicated region
      $region45: #{attn_block.4} parent=39 // pred_check
        %p370 = pneg %p78
      $region46: #{attn_block.4} parent=39 // pred_check_branch
        %372 = sbr.rel (%p370) target = $region48
      $region47: #{attn_block.4} parent=39 // pred_region
        %p373 = scmp.lt.s32.totalorder %s25, 1
        %s374 = scalar_select %p373, %s25, 1
        %s375 = scalar_lea.vmem %s1, %s374
      $region48: #{attn_block.4} parent=39 // pred_fallthru
        _
      // Predicated region
      $region49: #{attn_block.4} parent=39 // pred_check
        %p376 = pneg %p104
      $region50: #{attn_block.4} parent=39 // pred_check_branch
        %378 = sbr.rel (%p376) target = $region52
      $region51: #{attn_block.4} parent=39 // pred_region
        %p379 = scmp.lt.s32.totalorder %s25, 1
        %s380 = scalar_select %p379, %s25, 1
        %s381 = scalar_lea.vmem %s2, %s380
      $region52: #{attn_block.4} parent=39 // pred_fallthru
        _
    $region40: #{attn_block.4} parent=5 // pred_fallthru
      _
    %p382 = scmp.le.s32.totalorder 1, %s18
    %p383 = scmp.lt.s32.totalorder %s18, 3
    %p384 = pnand %p382, %p383
    %p385 = pneg %p384
    // Predicated region
    $region53: #{attn_block.4} parent=5 // pred_check
      _
    $region54: #{attn_block.4} parent=5 // pred_check_branch
      %387 = sbr.rel (%p384) target = $region56
    $region55: #{attn_block.4} parent=5 // pred_region
      %s388 = ssub.s32 %s18, 1
      %s389 = smul.u32 8, %s28
      %p390 = scmp.lt.s32.totalorder %s27, 1
      %s391 = scalar_select %p390, %s27, 1
      %p392 = scmp.lt.s32.totalorder %s389, 7
      %s393 = scalar_select %p392, %s389, 7
      %s394 = smul.addr %s391, 8
      %s395 = sadd.s32 %s393, %s394
      %s396 = smul.addr %s395, 8
      %s397 = scalar_lea.vmem %s0, %s396
      %p398 = pneg %p58
      %p399 = pneg %p55
      %p400 = scmp.lt.s32.totalorder %s27, 1
      %s401 = scalar_select %p400, %s27, 1
      %s402 = scalar_lea.vmem %s1, %s401
      %p403 = pneg %p84
      %p404 = pneg %p81
      %p405 = scmp.lt.s32.totalorder %s27, 1
      %s406 = scalar_select %p405, %s27, 1
      %s407 = scalar_lea.vmem %s2, %s406
      %p408 = pneg %p110
      %p409 = pneg %p107
      %p410 = pneg %p131
      %p411 = pneg %p128
      %p412 = pneg %p152
      %p413 = pneg %p149
      %p414 = pneg %p173
      %p415 = pneg %p170
      %p416 = pneg %p194
      %p417 = pneg %p191
      %p418 = pneg %p215
      %p419 = pneg %p212
      %p420 = pneg %p236
      %p421 = pneg %p233
      %p422 = pneg %p264
      %p423 = pneg %p261
      %s424 = smul.u32 8, %s28
      %p425 = scmp.lt.s32.totalorder %s27, 1
      %s426 = scalar_select %p425, %s27, 1
      %p427 = scmp.lt.s32.totalorder %s424, 7
      %s428 = scalar_select %p427, %s424, 7
      %s429 = smul.addr %s426, 8
      %s430 = sadd.s32 %s428, %s429
      %s431 = smul.addr %s430, 4
      %s432 = scalar_lea.vmem %s9, %s431
      %p433 = pneg %p292
      %p434 = pneg %p289
      %s435 = smul.u32 8, %s28
      %p436 = scmp.lt.s32.totalorder %s27, 1
      %s437 = scalar_select %p436, %s27, 1
      %p438 = scmp.lt.s32.totalorder %s435, 7
      %s439 = scalar_select %p438, %s435, 7
      %s440 = smul.addr %s437, 8
      %s441 = sadd.s32 %s439, %s440
      %s442 = smul.addr %s441, 4
      %s443 = scalar_lea.vmem %s10, %s442
      %p444 = pneg %p320
      %p445 = pneg %p317
      %s446 = smul.u32 8, %s28
      %p447 = scmp.lt.s32.totalorder %s27, 1
      %s448 = scalar_select %p447, %s27, 1
      %p449 = scmp.lt.s32.totalorder %s446, 7
      %s450 = scalar_select %p449, %s446, 7
      %s451 = smul.addr %s448, 8
      %s452 = sadd.s32 %s450, %s451
      %s453 = smul.addr %s452, 4
      %s454 = scalar_lea.vmem %s11, %s453
      %s455 = smul.u32 8, %s28
      %p456 = scmp.lt.s32.totalorder %s27, 1
      %s457 = scalar_select %p456, %s27, 1
      %p458 = scmp.lt.s32.totalorder %s455, 7
      %s459 = scalar_select %p458, %s455, 7
      %s460 = smul.addr %s457, 8
      %s461 = sadd.s32 %s459, %s460
      %s462 = smul.addr %s461, 8
      %s463 = scalar_lea.vmem %s0, %s462
      %s464 = smul.u32 8, %s28
      %p465 = scmp.lt.s32.totalorder %s27, 1
      %s466 = scalar_select %p465, %s27, 1
      %s467 = scalar_lea.vmem %s1, %s466
      %p468 = scmp.lt.s32.totalorder %s27, 1
      %s469 = scalar_select %p468, %s27, 1
      %s470 = scalar_lea.vmem %s2, %s469
      %s471 = smul.u32 8, %s28
      %p472 = scmp.lt.s32.totalorder %s27, 1
      %s473 = scalar_select %p472, %s27, 1
      %p474 = scmp.lt.s32.totalorder %s471, 7
      %s475 = scalar_select %p474, %s471, 7
      %s476 = smul.addr %s473, 8
      %s477 = sadd.s32 %s475, %s476
      %s478 = smul.addr %s477, 4
      %s479 = scalar_lea.vmem %s9, %s478
      %s480 = smul.u32 8, %s28
      %s481 = smul.u32 8, %s28
      %p482 = scmp.lt.s32.totalorder %s27, 1
      %s483 = scalar_select %p482, %s27, 1
      %p484 = scmp.lt.s32.totalorder %s481, 7
      %s485 = scalar_select %p484, %s481, 7
      %s486 = smul.addr %s483, 8
      %s487 = sadd.s32 %s485, %s486
      %s488 = smul.addr %s487, 4
      %s489 = scalar_lea.vmem %s10, %s488
      %s490 = smul.u32 8, %s28
      %s491 = smul.u32 8, %s28
      %p492 = scmp.lt.s32.totalorder %s27, 1
      %s493 = scalar_select %p492, %s27, 1
      %p494 = scmp.lt.s32.totalorder %s491, 7
      %s495 = scalar_select %p494, %s491, 7
      %s496 = smul.addr %s493, 8
      %s497 = sadd.s32 %s495, %s496
      %s498 = smul.addr %s497, 4
      %s499 = scalar_lea.vmem %s11, %s498
      %s500 = smul.u32 8, %s28
      %v502 = vld [vmem:[%s463] sm:$0xff]
      %v503 = vld [vmem:[%s463 + $0x8] sm:$0xff]
      %v504 = vld [vmem:[%s463 + $0x10] sm:$0xff]
      %v505 = vld [vmem:[%s463 + $0x18] sm:$0xff]
      %v506 = vld [vmem:[%s463 + $0x20] sm:$0xff]
      %v507 = vld [vmem:[%s463 + $0x28] sm:$0xff]
      %v508 = vld [vmem:[%s463 + $0x30] sm:$0xff]
      %v509 = vld [vmem:[%s463 + $0x38] sm:$0xff]
      %v510 = vld [vmem:[%s467] sm:$0x1]
      %v512 = vlaneseq
      %v513 = vshrl.u32 %v512, 7
      %v514 = vsub.s32 0, %v513
      %v515 = vrot.slane %v510, %v514
      %v517 = vmul.f32 %v502, %v515
      %v518 = vmul.f32 %v503, %v515
      %v519 = vmul.f32 %v504, %v515
      %v520 = vmul.f32 %v505, %v515
      %v521 = vmul.f32 %v506, %v515
      %v522 = vmul.f32 %v507, %v515
      %v523 = vmul.f32 %v508, %v515
      %v524 = vmul.f32 %v509, %v515
      %v525 = vld [vmem:[%s470] sm:$0x1]
      %v527 = vlaneseq
      %v528 = vshrl.u32 %v527, 7
      %v529 = vsub.s32 0, %v528
      %v530 = vrot.slane %v525, %v529
      %v532 = vadd.f32 %v517, %v530
      %v533 = vadd.f32 %v518, %v530
      %v534 = vadd.f32 %v519, %v530
      %v535 = vadd.f32 %v520, %v530
      %v536 = vadd.f32 %v521, %v530
      %v537 = vadd.f32 %v522, %v530
      %v538 = vadd.f32 %v523, %v530
      %v539 = vadd.f32 %v524, %v530
      %v540 = vpack.c.bf16 %v533, %v532
      %v541 = vpack.c.bf16 %v535, %v534
      %v542 = vpack.c.bf16 %v537, %v536
      %v543 = vpack.c.bf16 %v539, %v538
      %v544 = vld [vmem:[%s3] sm:$0xf]
      %v545 = vld [vmem:[%s3 + $0x4] sm:$0xf]
      %v546 = vld [vmem:[%s3 + $0x8] sm:$0xf]
      %v547 = vld [vmem:[%s3 + $0xc] sm:$0xf]
      %v548 = vld [vmem:[%s3 + $0x10] sm:$0xf]
      %v549 = vld [vmem:[%s3 + $0x14] sm:$0xf]
      %v550 = vld [vmem:[%s3 + $0x18] sm:$0xf]
      %v551 = vld [vmem:[%s3 + $0x1c] sm:$0xf]
      %v552 = vld [vmem:[%s4] sm:$0x1]
      %v554 = vlaneseq
      %v555 = vshrl.u32 %v554, 7
      %v556 = vsub.s32 0, %v555
      %v557 = vrot.slane %v552, %v556
      %v567 = vunpack.c.l.b16 %v544
      %v568 = vunpack.c.l.b16 %v545
      %v569 = vunpack.c.l.b16 %v546
      %v570 = vunpack.c.l.b16 %v547
      %v571 = vunpack.c.l.b16 %v548
      %v572 = vunpack.c.l.b16 %v549
      %v573 = vunpack.c.l.b16 %v550
      %v574 = vunpack.c.l.b16 %v551
      %v575 = vpack.c.b16 %v568, %v567
      %v576 = vpack.c.b16 %v570, %v569
      %v577 = vpack.c.b16 %v572, %v571
      %v578 = vpack.c.b16 %v574, %v573
      %vm583 = vcmask 523264
      %v585 = vsel %vm583, %v540, 0
      %v588 = vsel %vm583, %v541, 0
      %v591 = vsel %vm583, %v542, 0
      %v594 = vsel %vm583, %v543, 0
      %596 = vmatprep.subr.bf16.mxu0 0
      %597 = vmatpush1.bf16.msra.mxu0 0
      %598 = vmatprep.subr.bf16.mxu0 0
      %599 = vmatpush1.bf16.msra.mxu0 0
      %600 = vmatprep.subr.bf16.mxu0 0
      %601 = vmatpush1.bf16.msra.mxu0 0
      %602 = vmatprep.subr.bf16.mxu0 0
      %603 = vmatpush1.bf16.msra.mxu0 0
      %604 = vmatprep.subr.bf16.mxu0 0
      %605 = vmatpush1.bf16.msra.mxu0 %v578
      %606 = vmatprep.subr.bf16.mxu0 0
      %607 = vmatpush1.bf16.msra.mxu0 %v577
      %608 = vmatprep.subr.bf16.mxu0 0
      %609 = vmatpush1.bf16.msra.mxu0 %v576
      %610 = vmatprep.subr.bf16.mxu0 0
      %611 = vmatpush1.bf16.msra.mxu0 %v575
      %612 = vmatprep.subr.bf16.mxu0 0
      %613 = vmatpush2.bf16.msra.mxu0 0
      %614 = vmatprep.subr.bf16.mxu0 0
      %615 = vmatpush2.bf16.msra.mxu0 0
      %616 = vmatprep.subr.bf16.mxu0 0
      %617 = vmatpush2.bf16.msra.mxu0 0
      %618 = vmatprep.subr.bf16.mxu0 0
      %619 = vmatpush2.bf16.msra.mxu0 0
      %620 = vmatprep.subr.bf16.mxu0 0
      %621 = vmatpush2.bf16.msra.mxu0 0
      %622 = vmatprep.subr.bf16.mxu0 0
      %623 = vmatpush2.bf16.msra.mxu0 0
      %624 = vmatprep.subr.bf16.mxu0 0
      %625 = vmatpush2.bf16.msra.mxu0 0
      %626 = vmatprep.subr.bf16.mxu0 0
      %627 = vmatpush2.bf16.msra.mxu0 0
      %628 = vmatprep.mubr.bf16.mxu0 0
      %629 = vmatmul.mubr.bf16.gmra.mxu0 %v585
      %v630 = vpop.f32.mrf.mxu0
      %v631 = vadd.f32 %v557, %v630
      %v632 = vpop.f32.mrf.mxu0
      %v633 = vpop.f32.mrf.mxu0
      %v634 = vadd.f32 %v557, %v633
      %v635 = vpop.f32.mrf.mxu0
      %636 = vmatprep.mubr.bf16.mxu0 0
      %637 = vmatmul.mubr.bf16.gmra.mxu0 %v588
      %v638 = vpop.f32.mrf.mxu0
      %v639 = vadd.f32 %v557, %v638
      %v640 = vpop.f32.mrf.mxu0
      %v641 = vpop.f32.mrf.mxu0
      %v642 = vadd.f32 %v557, %v641
      %v643 = vpop.f32.mrf.mxu0
      %644 = vmatprep.mubr.bf16.mxu0 0
      %645 = vmatmul.mubr.bf16.gmra.mxu0 %v591
      %v646 = vpop.f32.mrf.mxu0
      %v647 = vadd.f32 %v557, %v646
      %v648 = vpop.f32.mrf.mxu0
      %v649 = vpop.f32.mrf.mxu0
      %v650 = vadd.f32 %v557, %v649
      %v651 = vpop.f32.mrf.mxu0
      %652 = vmatprep.mubr.bf16.mxu0 0
      %653 = vmatmul.mubr.bf16.gmra.mxu0 %v594
      %v654 = vpop.f32.mrf.mxu0
      %v655 = vadd.f32 %v557, %v654
      %v656 = vpop.f32.mrf.mxu0
      %v657 = vpop.f32.mrf.mxu0
      %v658 = vadd.f32 %v557, %v657
      %v659 = vpop.f32.mrf.mxu0
      %660 = vdwg.mxu0
      %v661 = vld [vmem:[%s5] sm:$0xf]
      %v662 = vld [vmem:[%s5 + $0x4] sm:$0xf]
      %v663 = vld [vmem:[%s5 + $0x8] sm:$0xf]
      %v664 = vld [vmem:[%s5 + $0xc] sm:$0xf]
      %v665 = vld [vmem:[%s5 + $0x10] sm:$0xf]
      %v666 = vld [vmem:[%s5 + $0x14] sm:$0xf]
      %v667 = vld [vmem:[%s5 + $0x18] sm:$0xf]
      %v668 = vld [vmem:[%s5 + $0x1c] sm:$0xf]
      %v669 = vld [vmem:[%s6] sm:$0x1]
      %v671 = vlaneseq
      %v672 = vshrl.u32 %v671, 7
      %v673 = vsub.s32 0, %v672
      %v674 = vrot.slane %v669, %v673
      %v684 = vunpack.c.l.b16 %v661
      %v685 = vunpack.c.l.b16 %v662
      %v686 = vunpack.c.l.b16 %v663
      %v687 = vunpack.c.l.b16 %v664
      %v688 = vunpack.c.l.b16 %v665
      %v689 = vunpack.c.l.b16 %v666
      %v690 = vunpack.c.l.b16 %v667
      %v691 = vunpack.c.l.b16 %v668
      %v692 = vpack.c.b16 %v685, %v684
      %v693 = vpack.c.b16 %v687, %v686
      %v694 = vpack.c.b16 %v689, %v688
      %v695 = vpack.c.b16 %v691, %v690
      %700 = vmatprep.subr.bf16.mxu0 0
      %701 = vmatpush1.bf16.msra.mxu0 0
      %702 = vmatprep.subr.bf16.mxu0 0
      %703 = vmatpush1.bf16.msra.mxu0 0
      %704 = vmatprep.subr.bf16.mxu0 0
      %705 = vmatpush1.bf16.msra.mxu0 0
      %706 = vmatprep.subr.bf16.mxu0 0
      %707 = vmatpush1.bf16.msra.mxu0 0
      %708 = vmatprep.subr.bf16.mxu0 0
      %709 = vmatpush1.bf16.msra.mxu0 %v695
      %710 = vmatprep.subr.bf16.mxu0 0
      %711 = vmatpush1.bf16.msra.mxu0 %v694
      %712 = vmatprep.subr.bf16.mxu0 0
      %713 = vmatpush1.bf16.msra.mxu0 %v693
      %714 = vmatprep.subr.bf16.mxu0 0
      %715 = vmatpush1.bf16.msra.mxu0 %v692
      %716 = vmatprep.subr.bf16.mxu0 0
      %717 = vmatpush2.bf16.msra.mxu0 0
      %718 = vmatprep.subr.bf16.mxu0 0
      %719 = vmatpush2.bf16.msra.mxu0 0
      %720 = vmatprep.subr.bf16.mxu0 0
      %721 = vmatpush2.bf16.msra.mxu0 0
      %722 = vmatprep.subr.bf16.mxu0 0
      %723 = vmatpush2.bf16.msra.mxu0 0
      %724 = vmatprep.subr.bf16.mxu0 0
      %725 = vmatpush2.bf16.msra.mxu0 0
      %726 = vmatprep.subr.bf16.mxu0 0
      %727 = vmatpush2.bf16.msra.mxu0 0
      %728 = vmatprep.subr.bf16.mxu0 0
      %729 = vmatpush2.bf16.msra.mxu0 0
      %730 = vmatprep.subr.bf16.mxu0 0
      %731 = vmatpush2.bf16.msra.mxu0 0
      %732 = vmatprep.mubr.bf16.mxu0 0
      %733 = vmatmul.mubr.bf16.gmra.mxu0 %v585
      %v734 = vpop.f32.mrf.mxu0
      %v735 = vadd.f32 %v674, %v734
      %v736 = vpop.f32.mrf.mxu0
      %v737 = vpop.f32.mrf.mxu0
      %v738 = vadd.f32 %v674, %v737
      %v739 = vpop.f32.mrf.mxu0
      %740 = vmatprep.mubr.bf16.mxu0 0
      %741 = vmatmul.mubr.bf16.gmra.mxu0 %v588
      %v742 = vpop.f32.mrf.mxu0
      %v743 = vadd.f32 %v674, %v742
      %v744 = vpop.f32.mrf.mxu0
      %v745 = vpop.f32.mrf.mxu0
      %v746 = vadd.f32 %v674, %v745
      %v747 = vpop.f32.mrf.mxu0
      %748 = vmatprep.mubr.bf16.mxu0 0
      %749 = vmatmul.mubr.bf16.gmra.mxu0 %v591
      %v750 = vpop.f32.mrf.mxu0
      %v751 = vadd.f32 %v674, %v750
      %v752 = vpop.f32.mrf.mxu0
      %v753 = vpop.f32.mrf.mxu0
      %v754 = vadd.f32 %v674, %v753
      %v755 = vpop.f32.mrf.mxu0
      %756 = vmatprep.mubr.bf16.mxu0 0
      %757 = vmatmul.mubr.bf16.gmra.mxu0 %v594
      %v758 = vpop.f32.mrf.mxu0
      %v759 = vadd.f32 %v674, %v758
      %v760 = vpop.f32.mrf.mxu0
      %v761 = vpop.f32.mrf.mxu0
      %v762 = vadd.f32 %v674, %v761
      %v763 = vpop.f32.mrf.mxu0
      %764 = vdwg.mxu0
      %v765 = vld [vmem:[%s7] sm:$0xf]
      %v766 = vld [vmem:[%s7 + $0x4] sm:$0xf]
      %v767 = vld [vmem:[%s7 + $0x8] sm:$0xf]
      %v768 = vld [vmem:[%s7 + $0xc] sm:$0xf]
      %v769 = vld [vmem:[%s7 + $0x10] sm:$0xf]
      %v770 = vld [vmem:[%s7 + $0x14] sm:$0xf]
      %v771 = vld [vmem:[%s7 + $0x18] sm:$0xf]
      %v772 = vld [vmem:[%s7 + $0x1c] sm:$0xf]
      %v773 = vld [vmem:[%s8] sm:$0x1]
      %v775 = vlaneseq
      %v776 = vshrl.u32 %v775, 7
      %v777 = vsub.s32 0, %v776
      %v778 = vrot.slane %v773, %v777
      %v788 = vunpack.c.l.b16 %v765
      %v789 = vunpack.c.l.b16 %v766
      %v790 = vunpack.c.l.b16 %v767
      %v791 = vunpack.c.l.b16 %v768
      %v792 = vunpack.c.l.b16 %v769
      %v793 = vunpack.c.l.b16 %v770
      %v794 = vunpack.c.l.b16 %v771
      %v795 = vunpack.c.l.b16 %v772
      %v796 = vpack.c.b16 %v789, %v788
      %v797 = vpack.c.b16 %v791, %v790
      %v798 = vpack.c.b16 %v793, %v792
      %v799 = vpack.c.b16 %v795, %v794
      %804 = vmatprep.subr.bf16.mxu0 0
      %805 = vmatpush1.bf16.msra.mxu0 0
      %806 = vmatprep.subr.bf16.mxu0 0
      %807 = vmatpush1.bf16.msra.mxu0 0
      %808 = vmatprep.subr.bf16.mxu0 0
      %809 = vmatpush1.bf16.msra.mxu0 0
      %810 = vmatprep.subr.bf16.mxu0 0
      %811 = vmatpush1.bf16.msra.mxu0 0
      %812 = vmatprep.subr.bf16.mxu0 0
      %813 = vmatpush1.bf16.msra.mxu0 %v799
      %814 = vmatprep.subr.bf16.mxu0 0
      %815 = vmatpush1.bf16.msra.mxu0 %v798
      %816 = vmatprep.subr.bf16.mxu0 0
      %817 = vmatpush1.bf16.msra.mxu0 %v797
      %818 = vmatprep.subr.bf16.mxu0 0
      %819 = vmatpush1.bf16.msra.mxu0 %v796
      %820 = vmatprep.subr.bf16.mxu0 0
      %821 = vmatpush2.bf16.msra.mxu0 0
      %822 = vmatprep.subr.bf16.mxu0 0
      %823 = vmatpush2.bf16.msra.mxu0 0
      %824 = vmatprep.subr.bf16.mxu0 0
      %825 = vmatpush2.bf16.msra.mxu0 0
      %826 = vmatprep.subr.bf16.mxu0 0
      %827 = vmatpush2.bf16.msra.mxu0 0
      %828 = vmatprep.subr.bf16.mxu0 0
      %829 = vmatpush2.bf16.msra.mxu0 0
      %830 = vmatprep.subr.bf16.mxu0 0
      %831 = vmatpush2.bf16.msra.mxu0 0
      %832 = vmatprep.subr.bf16.mxu0 0
      %833 = vmatpush2.bf16.msra.mxu0 0
      %834 = vmatprep.subr.bf16.mxu0 0
      %835 = vmatpush2.bf16.msra.mxu0 0
      %836 = vmatprep.mubr.bf16.mxu0 0
      %837 = vmatmul.mubr.bf16.gmra.mxu0 %v585
      %v838 = vpop.f32.mrf.mxu0
      %v839 = vadd.f32 %v778, %v838
      %v840 = vpop.f32.mrf.mxu0
      %v841 = vpop.f32.mrf.mxu0
      %v842 = vadd.f32 %v778, %v841
      %v843 = vpop.f32.mrf.mxu0
      %844 = vmatprep.mubr.bf16.mxu0 0
      %845 = vmatmul.mubr.bf16.gmra.mxu0 %v588
      %v846 = vpop.f32.mrf.mxu0
      %v847 = vadd.f32 %v778, %v846
      %v848 = vpop.f32.mrf.mxu0
      %v849 = vpop.f32.mrf.mxu0
      %v850 = vadd.f32 %v778, %v849
      %v851 = vpop.f32.mrf.mxu0
      %852 = vmatprep.mubr.bf16.mxu0 0
      %853 = vmatmul.mubr.bf16.gmra.mxu0 %v591
      %v854 = vpop.f32.mrf.mxu0
      %v855 = vadd.f32 %v778, %v854
      %v856 = vpop.f32.mrf.mxu0
      %v857 = vpop.f32.mrf.mxu0
      %v858 = vadd.f32 %v778, %v857
      %v859 = vpop.f32.mrf.mxu0
      %860 = vmatprep.mubr.bf16.mxu0 0
      %861 = vmatmul.mubr.bf16.gmra.mxu0 %v594
      %v862 = vpop.f32.mrf.mxu0
      %v863 = vadd.f32 %v778, %v862
      %v864 = vpop.f32.mrf.mxu0
      %v865 = vpop.f32.mrf.mxu0
      %v866 = vadd.f32 %v778, %v865
      %v867 = vpop.f32.mrf.mxu0
      %868 = vdwg.mxu0
      %v869 = vpack.c.bf16 %v634, %v631
      %v870 = vpack.c.bf16 %v642, %v639
      %v871 = vpack.c.bf16 %v650, %v647
      %v872 = vpack.c.bf16 %v658, %v655
      %v877 = vunpack.c.l.b16 %v869
      %v878 = vunpack.c.h.b16 %v869
      %v879 = vunpack.c.l.b16 %v870
      %v880 = vunpack.c.h.b16 %v870
      %v881 = vunpack.c.l.b16 %v871
      %v882 = vunpack.c.h.b16 %v871
      %v883 = vunpack.c.l.b16 %v872
      %v884 = vunpack.c.h.b16 %v872
      %v885 = vpack.c.b16 %v877, %v877
      %v886 = vpack.c.b16 %v878, %v878
      %v887 = vpack.c.b16 %v879, %v879
      %v888 = vpack.c.b16 %v880, %v880
      %v889 = vpack.c.b16 %v881, %v881
      %v890 = vpack.c.b16 %v882, %v882
      %v891 = vpack.c.b16 %v883, %v883
      %v892 = vpack.c.b16 %v884, %v884
      %vm901 = vcmask 519168
      %902 = vst.msk [vmem:[%s479] sm:$0xf] %vm901, %v885
      %903 = vst.msk [vmem:[%s479 + $0x4] sm:$0xf] %vm901, %v886
      %904 = vst.msk [vmem:[%s479 + $0x8] sm:$0xf] %vm901, %v887
      %905 = vst.msk [vmem:[%s479 + $0xc] sm:$0xf] %vm901, %v888
      %906 = vst.msk [vmem:[%s479 + $0x10] sm:$0xf] %vm901, %v889
      %907 = vst.msk [vmem:[%s479 + $0x14] sm:$0xf] %vm901, %v890
      %908 = vst.msk [vmem:[%s479 + $0x18] sm:$0xf] %vm901, %v891
      %909 = vst.msk [vmem:[%s479 + $0x1c] sm:$0xf] %vm901, %v892
      %v910 = vpack.c.bf16 %v738, %v735
      %v911 = vpack.c.bf16 %v746, %v743
      %v912 = vpack.c.bf16 %v754, %v751
      %v913 = vpack.c.bf16 %v762, %v759
      %v918 = vunpack.c.l.b16 %v910
      %v919 = vunpack.c.h.b16 %v910
      %v920 = vunpack.c.l.b16 %v911
      %v921 = vunpack.c.h.b16 %v911
      %v922 = vunpack.c.l.b16 %v912
      %v923 = vunpack.c.h.b16 %v912
      %v924 = vunpack.c.l.b16 %v913
      %v925 = vunpack.c.h.b16 %v913
      %v926 = vpack.c.b16 %v918, %v918
      %v927 = vpack.c.b16 %v919, %v919
      %v928 = vpack.c.b16 %v920, %v920
      %v929 = vpack.c.b16 %v921, %v921
      %v930 = vpack.c.b16 %v922, %v922
      %v931 = vpack.c.b16 %v923, %v923
      %v932 = vpack.c.b16 %v924, %v924
      %v933 = vpack.c.b16 %v925, %v925
      %942 = vst.msk [vmem:[%s489] sm:$0xf] %vm901, %v926
      %943 = vst.msk [vmem:[%s489 + $0x4] sm:$0xf] %vm901, %v927
      %944 = vst.msk [vmem:[%s489 + $0x8] sm:$0xf] %vm901, %v928
      %945 = vst.msk [vmem:[%s489 + $0xc] sm:$0xf] %vm901, %v929
      %946 = vst.msk [vmem:[%s489 + $0x10] sm:$0xf] %vm901, %v930
      %947 = vst.msk [vmem:[%s489 + $0x14] sm:$0xf] %vm901, %v931
      %948 = vst.msk [vmem:[%s489 + $0x18] sm:$0xf] %vm901, %v932
      %949 = vst.msk [vmem:[%s489 + $0x1c] sm:$0xf] %vm901, %v933
      %v950 = vpack.c.bf16 %v842, %v839
      %v951 = vpack.c.bf16 %v850, %v847
      %v952 = vpack.c.bf16 %v858, %v855
      %v953 = vpack.c.bf16 %v866, %v863
      %v958 = vunpack.c.l.b16 %v950
      %v959 = vunpack.c.h.b16 %v950
      %v960 = vunpack.c.l.b16 %v951
      %v961 = vunpack.c.h.b16 %v951
      %v962 = vunpack.c.l.b16 %v952
      %v963 = vunpack.c.h.b16 %v952
      %v964 = vunpack.c.l.b16 %v953
      %v965 = vunpack.c.h.b16 %v953
      %v966 = vpack.c.b16 %v958, %v958
      %v967 = vpack.c.b16 %v959, %v959
      %v968 = vpack.c.b16 %v960, %v960
      %v969 = vpack.c.b16 %v961, %v961
      %v970 = vpack.c.b16 %v962, %v962
      %v971 = vpack.c.b16 %v963, %v963
      %v972 = vpack.c.b16 %v964, %v964
      %v973 = vpack.c.b16 %v965, %v965
      %982 = vst.msk [vmem:[%s499] sm:$0xf] %vm901, %v966
      %983 = vst.msk [vmem:[%s499 + $0x4] sm:$0xf] %vm901, %v967
      %984 = vst.msk [vmem:[%s499 + $0x8] sm:$0xf] %vm901, %v968
      %985 = vst.msk [vmem:[%s499 + $0xc] sm:$0xf] %vm901, %v969
      %986 = vst.msk [vmem:[%s499 + $0x10] sm:$0xf] %vm901, %v970
      %987 = vst.msk [vmem:[%s499 + $0x14] sm:$0xf] %vm901, %v971
      %988 = vst.msk [vmem:[%s499 + $0x18] sm:$0xf] %vm901, %v972
      %989 = vst.msk [vmem:[%s499 + $0x1c] sm:$0xf] %vm901, %v973
      %s990 = smul.u32 8, %s28
      %p991 = scmp.lt.s32.totalorder %s27, 1
      %s992 = scalar_select %p991, %s27, 1
      %p993 = scmp.lt.s32.totalorder %s990, 7
      %s994 = scalar_select %p993, %s990, 7
      %s995 = smul.addr %s992, 8
      %s996 = sadd.s32 %s994, %s995
      %s997 = smul.addr %s996, 4
      %s998 = scalar_lea.vmem %s9, %s997
      %s999 = smul.u32 8, %s28
      %p1000 = scmp.lt.s32.totalorder %s27, 1
      %s1001 = scalar_select %p1000, %s27, 1
      %p1002 = scmp.lt.s32.totalorder %s999, 7
      %s1003 = scalar_select %p1002, %s999, 7
      %s1004 = smul.addr %s1001, 8
      %s1005 = sadd.s32 %s1003, %s1004
      %s1006 = smul.addr %s1005, 4
      %s1007 = scalar_lea.vmem %s10, %s1006
      %s1008 = smul.u32 8, %s28
      %p1009 = scmp.lt.s32.totalorder %s27, 1
      %s1010 = scalar_select %p1009, %s27, 1
      %p1011 = scmp.lt.s32.totalorder %s1008, 7
      %s1012 = scalar_select %p1011, %s1008, 7
      %s1013 = smul.addr %s1010, 8
      %s1014 = sadd.s32 %s1012, %s1013
      %s1015 = smul.addr %s1014, 4
      %s1016 = scalar_lea.vmem %s11, %s1015
      // Predicated region
      $region57: #{attn_block.4} parent=55 // pred_check
        %p1017 = pneg %p261
      $region58: #{attn_block.4} parent=55 // pred_check_branch
        %1019 = sbr.rel (%p1017) target = $region60
      $region59: #{attn_block.4} parent=55 // pred_region
        %s1020 = smul.u32 8, %s28
      $region60: #{attn_block.4} parent=55 // pred_fallthru
        _
      // Predicated region
      $region61: #{attn_block.4} parent=55 // pred_check
        %p1021 = pneg %p289
      $region62: #{attn_block.4} parent=55 // pred_check_branch
        %1023 = sbr.rel (%p1021) target = $region64
      $region63: #{attn_block.4} parent=55 // pred_region
        %s1024 = smul.u32 8, %s28
      $region64: #{attn_block.4} parent=55 // pred_fallthru
        _
      // Predicated region
      $region65: #{attn_block.4} parent=55 // pred_check
        %p1025 = pneg %p317
      $region66: #{attn_block.4} parent=55 // pred_check_branch
        %1027 = sbr.rel (%p1025) target = $region68
      $region67: #{attn_block.4} parent=55 // pred_region
        %s1028 = smul.u32 8, %s28
      $region68: #{attn_block.4} parent=55 // pred_fallthru
        _
    $region56: #{attn_block.4} parent=5 // pred_fallthru
      _
    %p1029 = scmp.le.s32.totalorder 2, %s18
    // Predicated region
    $region69: #{attn_block.4} parent=5 // pred_check
      %p1030 = pneg %p1029
    $region70: #{attn_block.4} parent=5 // pred_check_branch
      %1032 = sbr.rel (%p1030) target = $region72
    $region71: #{attn_block.4} parent=5 // pred_region
      %s1033 = ssub.s32 %s18, 2
      // Predicated region
      $region73: #{attn_block.4} parent=71 // pred_check
        %p1034 = pneg %p267
      $region74: #{attn_block.4} parent=71 // pred_check_branch
        %1036 = sbr.rel (%p1034) target = $region76
      $region75: #{attn_block.4} parent=71 // pred_region
        %s1037 = smul.u32 8, %s30
        %p1038 = scmp.lt.s32.totalorder %s29, 1
        %s1039 = scalar_select %p1038, %s29, 1
        %p1040 = scmp.lt.s32.totalorder %s1037, 7
        %s1041 = scalar_select %p1040, %s1037, 7
        %s1042 = smul.addr %s1039, 8
        %s1043 = sadd.s32 %s1041, %s1042
        %s1044 = smul.addr %s1043, 4
        %s1045 = scalar_lea.vmem %s9, %s1044
      $region76: #{attn_block.4} parent=71 // pred_fallthru
        _
      // Predicated region
      $region77: #{attn_block.4} parent=71 // pred_check
        %p1046 = pneg %p295
      $region78: #{attn_block.4} parent=71 // pred_check_branch
        %1048 = sbr.rel (%p1046) target = $region80
      $region79: #{attn_block.4} parent=71 // pred_region
        %s1049 = smul.u32 8, %s30
        %p1050 = scmp.lt.s32.totalorder %s29, 1
        %s1051 = scalar_select %p1050, %s29, 1
        %p1052 = scmp.lt.s32.totalorder %s1049, 7
        %s1053 = scalar_select %p1052, %s1049, 7
        %s1054 = smul.addr %s1051, 8
        %s1055 = sadd.s32 %s1053, %s1054
        %s1056 = smul.addr %s1055, 4
        %s1057 = scalar_lea.vmem %s10, %s1056
      $region80: #{attn_block.4} parent=71 // pred_fallthru
        _
      // Predicated region
      $region81: #{attn_block.4} parent=71 // pred_check
        %p1058 = pneg %p323
      $region82: #{attn_block.4} parent=71 // pred_check_branch
        %1060 = sbr.rel (%p1058) target = $region84
      $region83: #{attn_block.4} parent=71 // pred_region
        %s1061 = smul.u32 8, %s30
        %p1062 = scmp.lt.s32.totalorder %s29, 1
        %s1063 = scalar_select %p1062, %s29, 1
        %p1064 = scmp.lt.s32.totalorder %s1061, 7
        %s1065 = scalar_select %p1064, %s1061, 7
        %s1066 = smul.addr %s1063, 8
        %s1067 = sadd.s32 %s1065, %s1066
        %s1068 = smul.addr %s1067, 4
        %s1069 = scalar_lea.vmem %s11, %s1068
      $region84: #{attn_block.4} parent=71 // pred_fallthru
        _
    $region72: #{attn_block.4} parent=5 // pred_fallthru
      _
  $region6: #{attn_block.4} parent=0 // loop_footer
    %s22 = sadd.s32 1, %s18
  $region7: #{attn_block.4} parent=0 // loop_footer_branch
    %17 = sbr.rel target = $region3
  $region8: #{attn_block.4} parent=0 // loop_exit
    _

// kernel: attn_block.5
$region0: #{attn_block.5}
  #allocation0 [shape = 'u32[]', space=smem, size = 0x4, offset = 0x4, fixed_abs, tag = 'smem constant byte address 0x4 - core index']
  #allocation1 [shape = 'u32[144,128]{1,0:T(1,128)}', space=vmem, size = 0x12000, scoped, tag = 'internal scratch']
  #allocation2 [shape = 'f32[64,1]{1,0:T(8,128)}', space=vmem, size = 0x8000, scoped, tag = 'scratch operand']
  #allocation3 [shape = 'f32[64,1]{1,0:T(8,128)}', space=vmem, size = 0x8000, scoped, tag = 'scratch operand']
  #allocation4 [shape = 'f32[64,64]{1,0:T(8,128)}', space=vmem, size = 0x8000, scoped, tag = 'scratch operand']
  %s0 = inlined_call_operand.vmem [shape: bf16[2,64,64], index: 0, kind: input, shape index: {}]
  %s1 = inlined_call_operand.vmem [shape: bf16[2,64,64], index: 1, kind: input, shape index: {}]
  %s2 = inlined_call_operand.vmem [shape: bf16[2,64,64], index: 2, kind: input, shape index: {}]
  %s3 = inlined_call_operand.vmem [shape: f32[2,64,64], index: 3, kind: input, shape index: {}]
  %s4 = inlined_call_operand.vmem [shape: bf16[64,64], index: 4, kind: input, shape index: {}]
  %s5 = inlined_call_operand.vmem [shape: f32[1,64], index: 5, kind: input, shape index: {}]
  %s6 = inlined_call_operand.hbm [shape: f32[2,64,64], index: 6, kind: output, shape index: {}]
  %s7 = sld [smem:[#allocation0]]
  $region65: #{attn_block.5} parent=0
    _
  %s9 = ssub.s32 1, %s7
  %s10 = scalar_select 0, %s9, %s7
  $region1: #{attn_block.5} parent=0
    #allocation5 [shape = 'u8[65536]{0}', space=vmem, size = 0x10000, scoped, tag = 'output window, operand 0']
    #allocation6 [shape = 's32[2]{0}', space=sflag, size = 0x8, scoped, tag = 'scoped memory for attn_block.5']
    %11 = vsyncpa [#allocation6], 0
    %s12 = scalar_lea.sflag [#allocation6], 1
    %13 = vsyncpa %s12, 0
    loop: start=0, step=1, limit=4
    $region2: #{attn_block.5} parent=1 // loop_pre_header
      _
    $region3: #{attn_block.5} parent=1 // loop_header
      %s15 = sphi 0, %s19
      %p16 = scmp.ge.s32.totalorder %s15, 4
      %s22 = sphi 0, %s41
      %s23 = sphi 0, %s37
      %s24 = sphi 0, %s33
      %s25 = sphi 0, %s22
      %s26 = sphi 0, %s23
      %s27 = sphi 0, %s24
      %s28 = sphi 0, %s25
      %s29 = sphi 0, %s26
      %s30 = sphi 0, %s27
      %s46 = sphi 0, %s48
      %s49 = sphi 0, %s46
      %s50 = sphi 0, %s49
      %s66 = sphi 0, %s50
      %s74 = sphi 0, %s76
      %s77 = sphi 0, %s74
      %s78 = sphi 0, %s77
      %s94 = sphi 0, %s78
      %s102 = sphi 0, %s104
      %s105 = sphi 0, %s102
      %s106 = sphi 0, %s105
      %s122 = sphi 0, %s106
      %s130 = sphi 0, %s132
      %s133 = sphi 0, %s130
      %s134 = sphi 0, %s133
      %s150 = sphi 0, %s134
      %s154 = sphi 0, %s154
      %s156 = sphi 0, %s154
      %s157 = sphi 0, %s156
      %s171 = sphi 0, %s157
      %s175 = sphi 0, %s175
      %s177 = sphi 0, %s175
      %s178 = sphi 0, %s177
      %s192 = sphi 0, %s178
      %s200 = sphi 0, %s202
      %s203 = sphi 0, %s200
      %s204 = sphi 0, %s203
      %s220 = sphi 0, %s204
    $region4: #{attn_block.5} parent=1 // loop_header_branch
      %18 = sbr.rel (%p16) target = $region8
    $region5: #{attn_block.5} parent=1 // loop_body
      %s20 = ssub.s32 %s15, 1
      %s21 = ssub.s32 %s15, 2
      %s31 = sadd.s32 1, %s24
      %p32 = scmp.ge.s32.totalorder %s31, 1
      %s33 = scalar_select %p32, 0, %s31
      %s34 = sadd.s32 1, %s23
      %s35 = scalar_select %p32, %s34, %s23
      %p36 = scmp.ge.s32.totalorder %s35, 1
      %s37 = scalar_select %p36, 0, %s35
      %s38 = sadd.s32 1, %s22
      %s39 = scalar_select %p36, %s38, %s22
      %p40 = scmp.ge.s32.totalorder %s39, 2
      %s41 = scalar_select %p40, 0, %s39
      %s42 = ssub.s32 %s22, %s41
      %s43 = ssub.s32 %s23, %s37
      %s44 = sor.u32 %s42, %s43
      %p45 = scmp.eq.s32.totalorder %s44, 0
      %s47 = sadd.s32 %s46, 1
      %s48 = scalar_select %p45, %s46, %s47
      %p51 = pneg %p45
      %p52 = scmp.eq.s32.totalorder %s15, 1
      %p53 = por %p51, %p52
      %p54 = scmp.ne.s32.totalorder %s46, %s49
      %p55 = scmp.eq.s32.totalorder %s15, 0
      %p56 = por %p54, %p55
      %p57 = scmp.ne.s32.totalorder %s46, %s49
      %p58 = scmp.eq.s32.totalorder %s20, 1
      %p59 = por %p57, %p58
      %p60 = scmp.ne.s32.totalorder %s49, %s50
      %p61 = scmp.eq.s32.totalorder %s20, 0
      %p62 = por %p60, %p61
      %p63 = scmp.ne.s32.totalorder %s49, %s50
      %p64 = scmp.eq.s32.totalorder %s21, 1
      %p65 = por %p63, %p64
      %p67 = scmp.ne.s32.totalorder %s50, %s66
      %p68 = scmp.eq.s32.totalorder %s21, 0
      %p69 = por %p67, %p68
      %s70 = ssub.s32 %s22, %s41
      %s71 = ssub.s32 %s24, %s33
      %s72 = sor.u32 %s70, %s71
      %p73 = scmp.eq.s32.totalorder %s72, 0
      %s75 = sadd.s32 %s74, 1
      %s76 = scalar_select %p73, %s74, %s75
      %p79 = pneg %p73
      %p80 = scmp.eq.s32.totalorder %s15, 1
      %p81 = por %p79, %p80
      %p82 = scmp.ne.s32.totalorder %s74, %s77
      %p83 = scmp.eq.s32.totalorder %s15, 0
      %p84 = por %p82, %p83
      %p85 = scmp.ne.s32.totalorder %s74, %s77
      %p86 = scmp.eq.s32.totalorder %s20, 1
      %p87 = por %p85, %p86
      %p88 = scmp.ne.s32.totalorder %s77, %s78
      %p89 = scmp.eq.s32.totalorder %s20, 0
      %p90 = por %p88, %p89
      %p91 = scmp.ne.s32.totalorder %s77, %s78
      %p92 = scmp.eq.s32.totalorder %s21, 1
      %p93 = por %p91, %p92
      %p95 = scmp.ne.s32.totalorder %s78, %s94
      %p96 = scmp.eq.s32.totalorder %s21, 0
      %p97 = por %p95, %p96
      %s98 = ssub.s32 %s22, %s41
      %s99 = ssub.s32 %s24, %s33
      %s100 = sor.u32 %s98, %s99
      %p101 = scmp.eq.s32.totalorder %s100, 0
      %s103 = sadd.s32 %s102, 1
      %s104 = scalar_select %p101, %s102, %s103
      %p107 = pneg %p101
      %p108 = scmp.eq.s32.totalorder %s15, 1
      %p109 = por %p107, %p108
      %p110 = scmp.ne.s32.totalorder %s102, %s105
      %p111 = scmp.eq.s32.totalorder %s15, 0
      %p112 = por %p110, %p111
      %p113 = scmp.ne.s32.totalorder %s102, %s105
      %p114 = scmp.eq.s32.totalorder %s20, 1
      %p115 = por %p113, %p114
      %p116 = scmp.ne.s32.totalorder %s105, %s106
      %p117 = scmp.eq.s32.totalorder %s20, 0
      %p118 = por %p116, %p117
      %p119 = scmp.ne.s32.totalorder %s105, %s106
      %p120 = scmp.eq.s32.totalorder %s21, 1
      %p121 = por %p119, %p120
      %p123 = scmp.ne.s32.totalorder %s106, %s122
      %p124 = scmp.eq.s32.totalorder %s21, 0
      %p125 = por %p123, %p124
      %s126 = ssub.s32 %s22, %s41
      %s127 = ssub.s32 %s23, %s37
      %s128 = sor.u32 %s126, %s127
      %p129 = scmp.eq.s32.totalorder %s128, 0
      %s131 = sadd.s32 %s130, 1
      %s132 = scalar_select %p129, %s130, %s131
      %p135 = pneg %p129
      %p136 = scmp.eq.s32.totalorder %s15, 1
      %p137 = por %p135, %p136
      %p138 = scmp.ne.s32.totalorder %s130, %s133
      %p139 = scmp.eq.s32.totalorder %s15, 0
      %p140 = por %p138, %p139
      %p141 = scmp.ne.s32.totalorder %s130, %s133
      %p142 = scmp.eq.s32.totalorder %s20, 1
      %p143 = por %p141, %p142
      %p144 = scmp.ne.s32.totalorder %s133, %s134
      %p145 = scmp.eq.s32.totalorder %s20, 0
      %p146 = por %p144, %p145
      %p147 = scmp.ne.s32.totalorder %s133, %s134
      %p148 = scmp.eq.s32.totalorder %s21, 1
      %p149 = por %p147, %p148
      %p151 = scmp.ne.s32.totalorder %s134, %s150
      %p152 = scmp.eq.s32.totalorder %s21, 0
      %p153 = por %p151, %p152
      %s155 = sadd.s32 %s154, 1
      %p158 = scmp.eq.s32.totalorder %s15, 1
      %p159 = scmp.ne.s32.totalorder %s154, %s156
      %p160 = scmp.eq.s32.totalorder %s15, 0
      %p161 = por %p159, %p160
      %p162 = scmp.ne.s32.totalorder %s154, %s156
      %p163 = scmp.eq.s32.totalorder %s20, 1
      %p164 = por %p162, %p163
      %p165 = scmp.ne.s32.totalorder %s156, %s157
      %p166 = scmp.eq.s32.totalorder %s20, 0
      %p167 = por %p165, %p166
      %p168 = scmp.ne.s32.totalorder %s156, %s157
      %p169 = scmp.eq.s32.totalorder %s21, 1
      %p170 = por %p168, %p169
      %p172 = scmp.ne.s32.totalorder %s157, %s171
      %p173 = scmp.eq.s32.totalorder %s21, 0
      %p174 = por %p172, %p173
      %s176 = sadd.s32 %s175, 1
      %p179 = scmp.eq.s32.totalorder %s15, 1
      %p180 = scmp.ne.s32.totalorder %s175, %s177
      %p181 = scmp.eq.s32.totalorder %s15, 0
      %p182 = por %p180, %p181
      %p183 = scmp.ne.s32.totalorder %s175, %s177
      %p184 = scmp.eq.s32.totalorder %s20, 1
      %p185 = por %p183, %p184
      %p186 = scmp.ne.s32.totalorder %s177, %s178
      %p187 = scmp.eq.s32.totalorder %s20, 0
      %p188 = por %p186, %p187
      %p189 = scmp.ne.s32.totalorder %s177, %s178
      %p190 = scmp.eq.s32.totalorder %s21, 1
      %p191 = por %p189, %p190
      %p193 = scmp.ne.s32.totalorder %s178, %s192
      %p194 = scmp.eq.s32.totalorder %s21, 0
      %p195 = por %p193, %p194
      %s196 = ssub.s32 %s22, %s41
      %s197 = ssub.s32 %s23, %s37
      %s198 = sor.u32 %s196, %s197
      %p199 = scmp.eq.s32.totalorder %s198, 0
      %s201 = sadd.s32 %s200, 1
      %s202 = scalar_select %p199, %s200, %s201
      %p205 = pneg %p199
      %p206 = scmp.eq.s32.totalorder %s15, 1
      %p207 = por %p205, %p206
      %p208 = scmp.ne.s32.totalorder %s200, %s203
      %p209 = scmp.eq.s32.totalorder %s15, 0
      %p210 = por %p208, %p209
      %p211 = scmp.ne.s32.totalorder %s200, %s203
      %p212 = scmp.eq.s32.totalorder %s20, 1
      %p213 = por %p211, %p212
      %p214 = scmp.ne.s32.totalorder %s203, %s204
      %p215 = scmp.eq.s32.totalorder %s20, 0
      %p216 = por %p214, %p215
      %p217 = scmp.ne.s32.totalorder %s203, %s204
      %p218 = scmp.eq.s32.totalorder %s21, 1
      %p219 = por %p217, %p218
      %p221 = scmp.ne.s32.totalorder %s204, %s220
      %p222 = scmp.eq.s32.totalorder %s21, 0
      %p223 = por %p221, %p222
      %p224 = scmp.le.s32.totalorder 1, %s15
      %p225 = scmp.lt.s32.totalorder %s15, 3
      %p226 = pnand %p224, %p225
      %p227 = pneg %p226
      // Predicated region
      $region9: #{attn_block.5} parent=5 // pred_check
        _
      $region10: #{attn_block.5} parent=5 // pred_check_branch
        %229 = sbr.rel (%p226) target = $region12
      $region11: #{attn_block.5} parent=5 // pred_region
        %s230 = ssub.s32 %s15, 1
        // Predicated region
        $region13: #{attn_block.5} parent=11 // pred_check
          %p231 = pneg %p167
        $region14: #{attn_block.5} parent=11 // pred_check_branch
          %233 = sbr.rel (%p231) target = $region16
        $region15: #{attn_block.5} parent=11 // pred_region
          _
        $region16: #{attn_block.5} parent=11 // pred_fallthru
          _
        // Predicated region
        $region17: #{attn_block.5} parent=11 // pred_check
          %p234 = pneg %p188
        $region18: #{attn_block.5} parent=11 // pred_check_branch
          %236 = sbr.rel (%p234) target = $region20
        $region19: #{attn_block.5} parent=11 // pred_region
          _
        $region20: #{attn_block.5} parent=11 // pred_fallthru
          _
      $region12: #{attn_block.5} parent=5 // pred_fallthru
        _
      %p237 = scmp.lt.s32.totalorder %s15, 2
      // Predicated region
      $region21: #{attn_block.5} parent=5 // pred_check
        %p238 = pneg %p237
      $region22: #{attn_block.5} parent=5 // pred_check_branch
        %240 = sbr.rel (%p238) target = $region24
      $region23: #{attn_block.5} parent=5 // pred_region
        // Predicated region
        $region25: #{attn_block.5} parent=23 // pred_check
          %p241 = pneg %p56
        $region26: #{attn_block.5} parent=23 // pred_check_branch
          %243 = sbr.rel (%p241) target = $region28
        $region27: #{attn_block.5} parent=23 // pred_region
          %s244 = smul.u32 8, %s23
          %p245 = scmp.lt.s32.totalorder %s22, 1
          %s246 = scalar_select %p245, %s22, 1
          %p247 = scmp.lt.s32.totalorder %s244, 7
          %s248 = scalar_select %p247, %s244, 7
          %s249 = smul.addr %s246, 8
          %s250 = sadd.s32 %s248, %s249
          %s251 = smul.addr %s250, 4
          %s252 = scalar_lea.vmem %s0, %s251
          %s253 = smul.u32 8, %s23
        $region28: #{attn_block.5} parent=23 // pred_fallthru
          _
        // Predicated region
        $region29: #{attn_block.5} parent=23 // pred_check
          %p254 = pneg %p84
        $region30: #{attn_block.5} parent=23 // pred_check_branch
          %256 = sbr.rel (%p254) target = $region32
        $region31: #{attn_block.5} parent=23 // pred_region
          %s257 = smul.u32 8, %s24
          %p258 = scmp.lt.s32.totalorder %s22, 1
          %s259 = scalar_select %p258, %s22, 1
          %p260 = scmp.lt.s32.totalorder %s257, 7
          %s261 = scalar_select %p260, %s257, 7
          %s262 = smul.addr %s259, 8
          %s263 = sadd.s32 %s261, %s262
          %s264 = smul.addr %s263, 4
          %s265 = scalar_lea.vmem %s1, %s264
          %s266 = smul.u32 8, %s24
        $region32: #{attn_block.5} parent=23 // pred_fallthru
          _
        // Predicated region
        $region33: #{attn_block.5} parent=23 // pred_check
          %p267 = pneg %p112
        $region34: #{attn_block.5} parent=23 // pred_check_branch
          %269 = sbr.rel (%p267) target = $region36
        $region35: #{attn_block.5} parent=23 // pred_region
          %s270 = smul.u32 8, %s24
          %p271 = scmp.lt.s32.totalorder %s22, 1
          %s272 = scalar_select %p271, %s22, 1
          %p273 = scmp.lt.s32.totalorder %s270, 7
          %s274 = scalar_select %p273, %s270, 7
          %s275 = smul.addr %s272, 8
          %s276 = sadd.s32 %s274, %s275
          %s277 = smul.addr %s276, 4
          %s278 = scalar_lea.vmem %s2, %s277
          %s279 = smul.u32 8, %s24
        $region36: #{attn_block.5} parent=23 // pred_fallthru
          _
        // Predicated region
        $region37: #{attn_block.5} parent=23 // pred_check
          %p280 = pneg %p140
        $region38: #{attn_block.5} parent=23 // pred_check_branch
          %282 = sbr.rel (%p280) target = $region40
        $region39: #{attn_block.5} parent=23 // pred_region
          %s283 = smul.u32 8, %s23
          %p284 = scmp.lt.s32.totalorder %s22, 1
          %s285 = scalar_select %p284, %s22, 1
          %p286 = scmp.lt.s32.totalorder %s283, 7
          %s287 = scalar_select %p286, %s283, 7
          %s288 = smul.addr %s285, 8
          %s289 = sadd.s32 %s287, %s288
          %s290 = smul.addr %s289, 8
          %s291 = scalar_lea.vmem %s3, %s290
          %s292 = smul.u32 8, %s23
        $region40: #{attn_block.5} parent=23 // pred_fallthru
          _
      $region24: #{attn_block.5} parent=5 // pred_fallthru
        _
      %p293 = scmp.le.s32.totalorder 1, %s15
      %p294 = scmp.lt.s32.totalorder %s15, 3
      %p295 = pnand %p293, %p294
      %p296 = pneg %p295
      // Predicated region
      $region41: #{attn_block.5} parent=5 // pred_check
        _
      $region42: #{attn_block.5} parent=5 // pred_check_branch
        %298 = sbr.rel (%p295) target = $region44
      $region43: #{attn_block.5} parent=5 // pred_region
        %s299 = ssub.s32 %s15, 1
        %s300 = smul.u32 8, %s26
        %p301 = scmp.lt.s32.totalorder %s25, 1
        %s302 = scalar_select %p301, %s25, 1
        %p303 = scmp.lt.s32.totalorder %s300, 7
        %s304 = scalar_select %p303, %s300, 7
        %s305 = smul.addr %s302, 8
        %s306 = sadd.s32 %s304, %s305
        %s307 = smul.addr %s306, 4
        %s308 = scalar_lea.vmem %s0, %s307
        %p309 = pneg %p62
        %p310 = pneg %p59
        %s311 = smul.u32 8, %s27
        %p312 = scmp.lt.s32.totalorder %s25, 1
        %s313 = scalar_select %p312, %s25, 1
        %p314 = scmp.lt.s32.totalorder %s311, 7
        %s315 = scalar_select %p314, %s311, 7
        %s316 = smul.addr %s313, 8
        %s317 = sadd.s32 %s315, %s316
        %s318 = smul.addr %s317, 4
        %s319 = scalar_lea.vmem %s1, %s318
        %p320 = pneg %p90
        %p321 = pneg %p87
        %s322 = smul.u32 8, %s27
        %p323 = scmp.lt.s32.totalorder %s25, 1
        %s324 = scalar_select %p323, %s25, 1
        %p325 = scmp.lt.s32.totalorder %s322, 7
        %s326 = scalar_select %p325, %s322, 7
        %s327 = smul.addr %s324, 8
        %s328 = sadd.s32 %s326, %s327
        %s329 = smul.addr %s328, 4
        %s330 = scalar_lea.vmem %s2, %s329
        %p331 = pneg %p118
        %p332 = pneg %p115
        %s333 = smul.u32 8, %s26
        %p334 = scmp.lt.s32.totalorder %s25, 1
        %s335 = scalar_select %p334, %s25, 1
        %p336 = scmp.lt.s32.totalorder %s333, 7
        %s337 = scalar_select %p336, %s333, 7
        %s338 = smul.addr %s335, 8
        %s339 = sadd.s32 %s337, %s338
        %s340 = smul.addr %s339, 8
        %s341 = scalar_lea.vmem %s3, %s340
        %p342 = pneg %p146
        %p343 = pneg %p143
        %p344 = pneg %p167
        %p345 = pneg %p164
        %p346 = pneg %p188
        %p347 = pneg %p185
        %p348 = pneg %p216
        %p349 = pneg %p213
        %s350 = sand.u32 %s203, 1
        %s351 = scalar_lea.sflag [#allocation6], %s350
        %s352 = sand.u32 %s203, 1
        %s353 = smul.addr %s352, 64
        %s354 = scalar_lea.vmem [#allocation5], %s353
        %s355 = smul.u32 8, %s26
        %p356 = scmp.lt.s32.totalorder %s25, 1
        %s357 = scalar_select %p356, %s25, 1
        %p358 = scmp.lt.s32.totalorder %s355, 7
        %s359 = scalar_select %p358, %s355, 7
        %s360 = smul.addr %s357, 8
        %s361 = sadd.s32 %s359, %s360
        %s362 = smul.addr %s361, 4
        %s363 = scalar_lea.vmem %s0, %s362
        %s364 = smul.u32 8, %s26
        %s365 = smul.u32 8, %s27
        %p366 = scmp.lt.s32.totalorder %s25, 1
        %s367 = scalar_select %p366, %s25, 1
        %p368 = scmp.lt.s32.totalorder %s365, 7
        %s369 = scalar_select %p368, %s365, 7
        %s370 = smul.addr %s367, 8
        %s371 = sadd.s32 %s369, %s370
        %s372 = smul.addr %s371, 4
        %s373 = scalar_lea.vmem %s1, %s372
        %s374 = smul.u32 8, %s27
        %s375 = smul.u32 8, %s27
        %p376 = scmp.lt.s32.totalorder %s25, 1
        %s377 = scalar_select %p376, %s25, 1
        %p378 = scmp.lt.s32.totalorder %s375, 7
        %s379 = scalar_select %p378, %s375, 7
        %s380 = smul.addr %s377, 8
        %s381 = sadd.s32 %s379, %s380
        %s382 = smul.addr %s381, 4
        %s383 = scalar_lea.vmem %s2, %s382
        %s384 = smul.u32 8, %s27
        %s385 = smul.u32 8, %s26
        %p386 = scmp.lt.s32.totalorder %s25, 1
        %s387 = scalar_select %p386, %s25, 1
        %p388 = scmp.lt.s32.totalorder %s385, 7
        %s389 = scalar_select %p388, %s385, 7
        %s390 = smul.addr %s387, 8
        %s391 = sadd.s32 %s389, %s390
        %s392 = smul.addr %s391, 8
        %s393 = scalar_lea.vmem %s3, %s392
        %s394 = smul.u32 8, %s26
        %s395 = smul.u32 8, %s26
        %p397 = scmp.eq.s32.totalorder %s27, 0
        // Predicated region
        $region45: #{attn_block.5} parent=43 // pred_check
          %p398 = pneg %p397
        $region46: #{attn_block.5} parent=43 // pred_check_branch
          %400 = sbr.rel (%p398) target = $region48
        $region47: #{attn_block.5} parent=43 // pred_region
          %vm401 = vcmask 7168
          %402 = vst.msk [vmem:[#allocation2] sm:$0xff] %vm401, -inf
          %403 = vst.msk [vmem:[#allocation2 + $0x8] sm:$0xff] %vm401, -inf
          %404 = vst.msk [vmem:[#allocation2 + $0x10] sm:$0xff] %vm401, -inf
          %405 = vst.msk [vmem:[#allocation2 + $0x18] sm:$0xff] %vm401, -inf
          %406 = vst.msk [vmem:[#allocation2 + $0x20] sm:$0xff] %vm401, -inf
          %407 = vst.msk [vmem:[#allocation2 + $0x28] sm:$0xff] %vm401, -inf
          %408 = vst.msk [vmem:[#allocation2 + $0x30] sm:$0xff] %vm401, -inf
          %409 = vst.msk [vmem:[#allocation2 + $0x38] sm:$0xff] %vm401, -inf
          %410 = vst.msk [vmem:[#allocation3] sm:$0xff] %vm401, 0.0
          %411 = vst.msk [vmem:[#allocation3 + $0x8] sm:$0xff] %vm401, 0.0
          %412 = vst.msk [vmem:[#allocation3 + $0x10] sm:$0xff] %vm401, 0.0
          %413 = vst.msk [vmem:[#allocation3 + $0x18] sm:$0xff] %vm401, 0.0
          %414 = vst.msk [vmem:[#allocation3 + $0x20] sm:$0xff] %vm401, 0.0
          %415 = vst.msk [vmem:[#allocation3 + $0x28] sm:$0xff] %vm401, 0.0
          %416 = vst.msk [vmem:[#allocation3 + $0x30] sm:$0xff] %vm401, 0.0
          %417 = vst.msk [vmem:[#allocation3 + $0x38] sm:$0xff] %vm401, 0.0
          %vm418 = vcmask 523264
          %419 = vst.msk [vmem:[#allocation4] sm:$0xff] %vm418, 0.0
          %420 = vst.msk [vmem:[#allocation4 + $0x8] sm:$0xff] %vm418, 0.0
          %421 = vst.msk [vmem:[#allocation4 + $0x10] sm:$0xff] %vm418, 0.0
          %422 = vst.msk [vmem:[#allocation4 + $0x18] sm:$0xff] %vm418, 0.0
          %423 = vst.msk [vmem:[#allocation4 + $0x20] sm:$0xff] %vm418, 0.0
          %424 = vst.msk [vmem:[#allocation4 + $0x28] sm:$0xff] %vm418, 0.0
          %425 = vst.msk [vmem:[#allocation4 + $0x30] sm:$0xff] %vm418, 0.0
          %426 = vst.msk [vmem:[#allocation4 + $0x38] sm:$0xff] %vm418, 0.0
        $region48: #{attn_block.5} parent=43 // pred_fallthru
          _
        %v427 = vld [vmem:[%s363] sm:$0xf]
        %v428 = vld [vmem:[%s363 + $0x4] sm:$0xf]
        %v429 = vld [vmem:[%s363 + $0x8] sm:$0xf]
        %v430 = vld [vmem:[%s363 + $0xc] sm:$0xf]
        %v431 = vld [vmem:[%s363 + $0x10] sm:$0xf]
        %v432 = vld [vmem:[%s363 + $0x14] sm:$0xf]
        %v433 = vld [vmem:[%s363 + $0x18] sm:$0xf]
        %v434 = vld [vmem:[%s363 + $0x1c] sm:$0xf]
        %v435 = vld [vmem:[%s373] sm:$0xf]
        %v436 = vld [vmem:[%s373 + $0x4] sm:$0xf]
        %v437 = vld [vmem:[%s373 + $0x8] sm:$0xf]
        %v438 = vld [vmem:[%s373 + $0xc] sm:$0xf]
        %v439 = vld [vmem:[%s373 + $0x10] sm:$0xf]
        %v440 = vld [vmem:[%s373 + $0x14] sm:$0xf]
        %v441 = vld [vmem:[%s373 + $0x18] sm:$0xf]
        %v442 = vld [vmem:[%s373 + $0x1c] sm:$0xf]
        %v451 = vunpack.c.l.b16 %v427
        %v452 = vunpack.c.l.b16 %v428
        %v453 = vunpack.c.l.b16 %v429
        %v454 = vunpack.c.l.b16 %v430
        %v455 = vunpack.c.l.b16 %v431
        %v456 = vunpack.c.l.b16 %v432
        %v457 = vunpack.c.l.b16 %v433
        %v458 = vunpack.c.l.b16 %v434
        %v459 = vpack.c.b16 %v452, %v451
        %v460 = vpack.c.b16 %v454, %v453
        %v461 = vpack.c.b16 %v456, %v455
        %v462 = vpack.c.b16 %v458, %v457
        %v471 = vunpack.c.l.b16 %v435
        %v472 = vunpack.c.l.b16 %v436
        %v473 = vunpack.c.l.b16 %v437
        %v474 = vunpack.c.l.b16 %v438
        %v475 = vunpack.c.l.b16 %v439
        %v476 = vunpack.c.l.b16 %v440
        %v477 = vunpack.c.l.b16 %v441
        %v478 = vunpack.c.l.b16 %v442
        %v479 = vpack.c.b16 %v472, %v471
        %v480 = vpack.c.b16 %v474, %v473
        %v481 = vpack.c.b16 %v476, %v475
        %v482 = vpack.c.b16 %v478, %v477
        %vm483 = vcmask 523264
        %v485 = vsel %vm483, %v459, 0
        %v488 = vsel %vm483, %v460, 0
        %v491 = vsel %vm483, %v461, 0
        %v494 = vsel %vm483, %v462, 0
        %v497 = vsel %vm483, %v479, 0
        %v500 = vsel %vm483, %v480, 0
        %v503 = vsel %vm483, %v481, 0
        %v506 = vsel %vm483, %v482, 0
        %508 = vmatprep.subr.bf16.mxu0 0
        %509 = vmatpush1.bf16.xpose.msra.mxu0 0
        %510 = vmatprep.subr.bf16.mxu0 0
        %511 = vmatpush1.bf16.xpose.msra.mxu0 0
        %512 = vmatprep.subr.bf16.mxu0 0
        %513 = vmatpush1.bf16.xpose.msra.mxu0 0
        %514 = vmatprep.subr.bf16.mxu0 0
        %515 = vmatpush1.bf16.xpose.msra.mxu0 0
        %516 = vmatprep.subr.bf16.mxu0 0
        %517 = vmatpush1.bf16.xpose.msra.mxu0 %v506
        %518 = vmatprep.subr.bf16.mxu0 0
        %519 = vmatpush1.bf16.xpose.msra.mxu0 %v503
        %520 = vmatprep.subr.bf16.mxu0 0
        %521 = vmatpush1.bf16.xpose.msra.mxu0 %v500
        %522 = vmatprep.subr.bf16.mxu0 0
        %523 = vmatpush1.bf16.xpose.msra.mxu0 %v497
        %524 = vmatprep.subr.bf16.mxu0 0
        %525 = vmatpush2.bf16.xpose.msra.mxu0 0
        %526 = vmatprep.subr.bf16.mxu0 0
        %527 = vmatpush2.bf16.xpose.msra.mxu0 0
        %528 = vmatprep.subr.bf16.mxu0 0
        %529 = vmatpush2.bf16.xpose.msra.mxu0 0
        %530 = vmatprep.subr.bf16.mxu0 0
        %531 = vmatpush2.bf16.xpose.msra.mxu0 0
        %532 = vmatprep.subr.bf16.mxu0 0
        %533 = vmatpush2.bf16.xpose.msra.mxu0 0
        %534 = vmatprep.subr.bf16.mxu0 0
        %535 = vmatpush2.bf16.xpose.msra.mxu0 0
        %536 = vmatprep.subr.bf16.mxu0 0
        %537 = vmatpush2.bf16.xpose.msra.mxu0 0
        %538 = vmatprep.subr.bf16.mxu0 0
        %539 = vmatpush2.bf16.xpose.msra.mxu0 0
        %540 = vmatprep.mubr.bf16.mxu0 0
        %541 = vmatmul.mubr.bf16.gmra.mxu0 %v485
        %v542 = vpop.f32.mrf.mxu0
        %v543 = vadd.f32 0.0, %v542
        %v544 = vpop.f32.mrf.mxu0
        %v545 = vpop.f32.mrf.mxu0
        %v546 = vadd.f32 0.0, %v545
        %v547 = vpop.f32.mrf.mxu0
        %548 = vmatprep.mubr.bf16.mxu0 0
        %549 = vmatmul.mubr.bf16.gmra.mxu0 %v488
        %v550 = vpop.f32.mrf.mxu0
        %v551 = vadd.f32 0.0, %v550
        %v552 = vpop.f32.mrf.mxu0
        %v553 = vpop.f32.mrf.mxu0
        %v554 = vadd.f32 0.0, %v553
        %v555 = vpop.f32.mrf.mxu0
        %556 = vmatprep.mubr.bf16.mxu0 0
        %557 = vmatmul.mubr.bf16.gmra.mxu0 %v491
        %v558 = vpop.f32.mrf.mxu0
        %v559 = vadd.f32 0.0, %v558
        %v560 = vpop.f32.mrf.mxu0
        %v561 = vpop.f32.mrf.mxu0
        %v562 = vadd.f32 0.0, %v561
        %v563 = vpop.f32.mrf.mxu0
        %564 = vmatprep.mubr.bf16.mxu0 0
        %565 = vmatmul.mubr.bf16.gmra.mxu0 %v494
        %v566 = vpop.f32.mrf.mxu0
        %v567 = vadd.f32 0.0, %v566
        %v568 = vpop.f32.mrf.mxu0
        %v569 = vpop.f32.mrf.mxu0
        %v570 = vadd.f32 0.0, %v569
        %v571 = vpop.f32.mrf.mxu0
        %572 = vdwg.mxu0
        %v573 = vld [vmem:[#allocation2] sm:$0xff]
        %v574 = vld [vmem:[#allocation2 + $0x8] sm:$0xff]
        %v575 = vld [vmem:[#allocation2 + $0x10] sm:$0xff]
        %v576 = vld [vmem:[#allocation2 + $0x18] sm:$0xff]
        %v577 = vld [vmem:[#allocation2 + $0x20] sm:$0xff]
        %v578 = vld [vmem:[#allocation2 + $0x28] sm:$0xff]
        %v579 = vld [vmem:[#allocation2 + $0x30] sm:$0xff]
        %v580 = vld [vmem:[#allocation2 + $0x38] sm:$0xff]
        %v581 = vsel %vm483, %v543, -inf
        %582 = vmax.xlane.f32.xlu0 %v581
        %v583 = vpop.xlane.xlu0 %582
        %v584 = vsel %vm483, %v546, -inf
        %585 = vmax.xlane.f32.xlu0 %v584
        %v586 = vpop.xlane.xlu0 %585
        %v587 = vsel %vm483, %v551, -inf
        %588 = vmax.xlane.f32.xlu0 %v587
        %v589 = vpop.xlane.xlu0 %588
        %v590 = vsel %vm483, %v554, -inf
        %591 = vmax.xlane.f32.xlu0 %v590
        %v592 = vpop.xlane.xlu0 %591
        %v593 = vsel %vm483, %v559, -inf
        %594 = vmax.xlane.f32.xlu0 %v593
        %v595 = vpop.xlane.xlu0 %594
        %v596 = vsel %vm483, %v562, -inf
        %597 = vmax.xlane.f32.xlu0 %v596
        %v598 = vpop.xlane.xlu0 %597
        %v599 = vsel %vm483, %v567, -inf
        %600 = vmax.xlane.f32.xlu0 %v599
        %v601 = vpop.xlane.xlu0 %600
        %v602 = vsel %vm483, %v570, -inf
        %603 = vmax.xlane.f32.xlu0 %v602
        %v604 = vpop.xlane.xlu0 %603
        %v605 = vmax.f32 %v573, %v583
        %v606 = vmax.f32 %v574, %v586
        %v607 = vmax.f32 %v575, %v589
        %v608 = vmax.f32 %v576, %v592
        %v609 = vmax.f32 %v577, %v595
        %v610 = vmax.f32 %v578, %v598
        %v611 = vmax.f32 %v579, %v601
        %v612 = vmax.f32 %v580, %v604
        %v613 = vsub.f32 %v573, %v605
        %v614 = vsub.f32 %v574, %v606
        %v615 = vsub.f32 %v575, %v607
        %v616 = vsub.f32 %v576, %v608
        %v617 = vsub.f32 %v577, %v609
        %v618 = vsub.f32 %v578, %v610
        %v619 = vsub.f32 %v579, %v611
        %v620 = vsub.f32 %v580, %v612
        %v621 = vmul.f32 %v613, 1.442695
        %v622 = vpow.pop %v621
        %v623 = vmul.f32 %v614, 1.442695
        %v624 = vpow.pop %v623
        %v625 = vmul.f32 %v615, 1.442695
        %v626 = vpow.pop %v625
        %v627 = vmul.f32 %v616, 1.442695
        %v628 = vpow.pop %v627
        %v629 = vmul.f32 %v617, 1.442695
        %v630 = vpow.pop %v629
        %v631 = vmul.f32 %v618, 1.442695
        %v632 = vpow.pop %v631
        %v633 = vmul.f32 %v619, 1.442695
        %v634 = vpow.pop %v633
        %v635 = vmul.f32 %v620, 1.442695
        %v636 = vpow.pop %v635
        %638 = vset.pattern.permute.xlu0 0
        %639 = vperm.xlu0 %638, %v605
        %v640 = vpop.permute.xlu0 %639
        %643 = vset.pattern.permute.xlu0 0
        %644 = vperm.xlu0 %643, %v606
        %v645 = vpop.permute.xlu0 %644
        %648 = vset.pattern.permute.xlu0 0
        %649 = vperm.xlu0 %648, %v607
        %v650 = vpop.permute.xlu0 %649
        %653 = vset.pattern.permute.xlu0 0
        %654 = vperm.xlu0 %653, %v608
        %v655 = vpop.permute.xlu0 %654
        %658 = vset.pattern.permute.xlu0 0
        %659 = vperm.xlu0 %658, %v609
        %v660 = vpop.permute.xlu0 %659
        %663 = vset.pattern.permute.xlu0 0
        %664 = vperm.xlu0 %663, %v610
        %v665 = vpop.permute.xlu0 %664
        %668 = vset.pattern.permute.xlu0 0
        %669 = vperm.xlu0 %668, %v611
        %v670 = vpop.permute.xlu0 %669
        %673 = vset.pattern.permute.xlu0 0
        %674 = vperm.xlu0 %673, %v612
        %v675 = vpop.permute.xlu0 %674
        %v677 = vsub.f32 %v543, %v640
        %v678 = vsub.f32 %v546, %v645
        %v679 = vsub.f32 %v551, %v650
        %v680 = vsub.f32 %v554, %v655
        %v681 = vsub.f32 %v559, %v660
        %v682 = vsub.f32 %v562, %v665
        %v683 = vsub.f32 %v567, %v670
        %v684 = vsub.f32 %v570, %v675
        %v685 = vmul.f32 %v677, 1.442695
        %v686 = vpow.pop %v685
        %v687 = vmul.f32 %v678, 1.442695
        %v688 = vpow.pop %v687
        %v689 = vmul.f32 %v679, 1.442695
        %v690 = vpow.pop %v689
        %v691 = vmul.f32 %v680, 1.442695
        %v692 = vpow.pop %v691
        %v693 = vmul.f32 %v681, 1.442695
        %v694 = vpow.pop %v693
        %v695 = vmul.f32 %v682, 1.442695
        %v696 = vpow.pop %v695
        %v697 = vmul.f32 %v683, 1.442695
        %v698 = vpow.pop %v697
        %v699 = vmul.f32 %v684, 1.442695
        %v700 = vpow.pop %v699
        %v701 = vld [vmem:[#allocation3] sm:$0xff]
        %v702 = vld [vmem:[#allocation3 + $0x8] sm:$0xff]
        %v703 = vld [vmem:[#allocation3 + $0x10] sm:$0xff]
        %v704 = vld [vmem:[#allocation3 + $0x18] sm:$0xff]
        %v705 = vld [vmem:[#allocation3 + $0x20] sm:$0xff]
        %v706 = vld [vmem:[#allocation3 + $0x28] sm:$0xff]
        %v707 = vld [vmem:[#allocation3 + $0x30] sm:$0xff]
        %v708 = vld [vmem:[#allocation3 + $0x38] sm:$0xff]
        %v709 = vmul.f32 %v622, %v701
        %v710 = vmul.f32 %v624, %v702
        %v711 = vmul.f32 %v626, %v703
        %v712 = vmul.f32 %v628, %v704
        %v713 = vmul.f32 %v630, %v705
        %v714 = vmul.f32 %v632, %v706
        %v715 = vmul.f32 %v634, %v707
        %v716 = vmul.f32 %v636, %v708
        %v717 = vsel %vm483, %v686, 0.0
        %718 = vadd.xlane.f32.xlu0 %v717
        %v719 = vpop.xlane.xlu0 %718
        %v720 = vsel %vm483, %v688, 0.0
        %721 = vadd.xlane.f32.xlu0 %v720
        %v722 = vpop.xlane.xlu0 %721
        %v723 = vsel %vm483, %v690, 0.0
        %724 = vadd.xlane.f32.xlu0 %v723
        %v725 = vpop.xlane.xlu0 %724
        %v726 = vsel %vm483, %v692, 0.0
        %727 = vadd.xlane.f32.xlu0 %v726
        %v728 = vpop.xlane.xlu0 %727
        %v729 = vsel %vm483, %v694, 0.0
        %730 = vadd.xlane.f32.xlu0 %v729
        %v731 = vpop.xlane.xlu0 %730
        %v732 = vsel %vm483, %v696, 0.0
        %733 = vadd.xlane.f32.xlu0 %v732
        %v734 = vpop.xlane.xlu0 %733
        %v735 = vsel %vm483, %v698, 0.0
        %736 = vadd.xlane.f32.xlu0 %v735
        %v737 = vpop.xlane.xlu0 %736
        %v738 = vsel %vm483, %v700, 0.0
        %739 = vadd.xlane.f32.xlu0 %v738
        %v740 = vpop.xlane.xlu0 %739
        %v741 = vadd.f32 %v709, %v719
        %v742 = vadd.f32 %v710, %v722
        %v743 = vadd.f32 %v711, %v725
        %v744 = vadd.f32 %v712, %v728
        %v745 = vadd.f32 %v713, %v731
        %v746 = vadd.f32 %v714, %v734
        %v747 = vadd.f32 %v715, %v737
        %v748 = vadd.f32 %v716, %v740
        %vm749 = vcmask 7168
        %750 = vst.msk [vmem:[#allocation3] sm:$0xff] %vm749, %v741
        %751 = vst.msk [vmem:[#allocation3 + $0x8] sm:$0xff] %vm749, %v742
        %752 = vst.msk [vmem:[#allocation3 + $0x10] sm:$0xff] %vm749, %v743
        %753 = vst.msk [vmem:[#allocation3 + $0x18] sm:$0xff] %vm749, %v744
        %754 = vst.msk [vmem:[#allocation3 + $0x20] sm:$0xff] %vm749, %v745
        %755 = vst.msk [vmem:[#allocation3 + $0x28] sm:$0xff] %vm749, %v746
        %756 = vst.msk [vmem:[#allocation3 + $0x30] sm:$0xff] %vm749, %v747
        %757 = vst.msk [vmem:[#allocation3 + $0x38] sm:$0xff] %vm749, %v748
        %v758 = vld [vmem:[#allocation4] sm:$0xff]
        %v759 = vld [vmem:[#allocation4 + $0x8] sm:$0xff]
        %v760 = vld [vmem:[#allocation4 + $0x10] sm:$0xff]
        %v761 = vld [vmem:[#allocation4 + $0x18] sm:$0xff]
        %v762 = vld [vmem:[#allocation4 + $0x20] sm:$0xff]
        %v763 = vld [vmem:[#allocation4 + $0x28] sm:$0xff]
        %v764 = vld [vmem:[#allocation4 + $0x30] sm:$0xff]
        %v765 = vld [vmem:[#allocation4 + $0x38] sm:$0xff]
        %767 = vset.pattern.permute.xlu0 0
        %768 = vperm.xlu0 %767, %v622
        %v769 = vpop.permute.xlu0 %768
        %772 = vset.pattern.permute.xlu0 0
        %773 = vperm.xlu0 %772, %v624
        %v774 = vpop.permute.xlu0 %773
        %777 = vset.pattern.permute.xlu0 0
        %778 = vperm.xlu0 %777, %v626
        %v779 = vpop.permute.xlu0 %778
        %782 = vset.pattern.permute.xlu0 0
        %783 = vperm.xlu0 %782, %v628
        %v784 = vpop.permute.xlu0 %783
        %787 = vset.pattern.permute.xlu0 0
        %788 = vperm.xlu0 %787, %v630
        %v789 = vpop.permute.xlu0 %788
        %792 = vset.pattern.permute.xlu0 0
        %793 = vperm.xlu0 %792, %v632
        %v794 = vpop.permute.xlu0 %793
        %797 = vset.pattern.permute.xlu0 0
        %798 = vperm.xlu0 %797, %v634
        %v799 = vpop.permute.xlu0 %798
        %802 = vset.pattern.permute.xlu0 0
        %803 = vperm.xlu0 %802, %v636
        %v804 = vpop.permute.xlu0 %803
        %v806 = vmul.f32 %v769, %v758
        %v807 = vmul.f32 %v774, %v759
        %v808 = vmul.f32 %v779, %v760
        %v809 = vmul.f32 %v784, %v761
        %v810 = vmul.f32 %v789, %v762
        %v811 = vmul.f32 %v794, %v763
        %v812 = vmul.f32 %v799, %v764
        %v813 = vmul.f32 %v804, %v765
        %v814 = vpack.c.bf16 %v688, %v686
        %v815 = vpack.c.bf16 %v692, %v690
        %v816 = vpack.c.bf16 %v696, %v694
        %v817 = vpack.c.bf16 %v700, %v698
        %v818 = vld [vmem:[%s383] sm:$0xf]
        %v819 = vld [vmem:[%s383 + $0x4] sm:$0xf]
        %v820 = vld [vmem:[%s383 + $0x8] sm:$0xf]
        %v821 = vld [vmem:[%s383 + $0xc] sm:$0xf]
        %v822 = vld [vmem:[%s383 + $0x10] sm:$0xf]
        %v823 = vld [vmem:[%s383 + $0x14] sm:$0xf]
        %v824 = vld [vmem:[%s383 + $0x18] sm:$0xf]
        %v825 = vld [vmem:[%s383 + $0x1c] sm:$0xf]
        %v834 = vunpack.c.l.b16 %v818
        %v835 = vunpack.c.l.b16 %v819
        %v836 = vunpack.c.l.b16 %v820
        %v837 = vunpack.c.l.b16 %v821
        %v838 = vunpack.c.l.b16 %v822
        %v839 = vunpack.c.l.b16 %v823
        %v840 = vunpack.c.l.b16 %v824
        %v841 = vunpack.c.l.b16 %v825
        %v842 = vpack.c.b16 %v835, %v834
        %v843 = vpack.c.b16 %v837, %v836
        %v844 = vpack.c.b16 %v839, %v838
        %v845 = vpack.c.b16 %v841, %v840
        %v851 = vsel %vm483, %v814, 0
        %v854 = vsel %vm483, %v815, 0
        %v857 = vsel %vm483, %v816, 0
        %v860 = vsel %vm483, %v817, 0
        %862 = vmatprep.subr.bf16.mxu0 0
        %863 = vmatpush1.bf16.msra.mxu0 0
        %864 = vmatprep.subr.bf16.mxu0 0
        %865 = vmatpush1.bf16.msra.mxu0 0
        %866 = vmatprep.subr.bf16.mxu0 0
        %867 = vmatpush1.bf16.msra.mxu0 0
        %868 = vmatprep.subr.bf16.mxu0 0
        %869 = vmatpush1.bf16.msra.mxu0 0
        %870 = vmatprep.subr.bf16.mxu0 0
        %871 = vmatpush1.bf16.msra.mxu0 %v845
        %872 = vmatprep.subr.bf16.mxu0 0
        %873 = vmatpush1.bf16.msra.mxu0 %v844
        %874 = vmatprep.subr.bf16.mxu0 0
        %875 = vmatpush1.bf16.msra.mxu0 %v843
        %876 = vmatprep.subr.bf16.mxu0 0
        %877 = vmatpush1.bf16.msra.mxu0 %v842
        %878 = vmatprep.subr.bf16.mxu0 0
        %879 = vmatpush2.bf16.msra.mxu0 0
        %880 = vmatprep.subr.bf16.mxu0 0
        %881 = vmatpush2.bf16.msra.mxu0 0
        %882 = vmatprep.subr.bf16.mxu0 0
        %883 = vmatpush2.bf16.msra.mxu0 0
        %884 = vmatprep.subr.bf16.mxu0 0
        %885 = vmatpush2.bf16.msra.mxu0 0
        %886 = vmatprep.subr.bf16.mxu0 0
        %887 = vmatpush2.bf16.msra.mxu0 0
        %888 = vmatprep.subr.bf16.mxu0 0
        %889 = vmatpush2.bf16.msra.mxu0 0
        %890 = vmatprep.subr.bf16.mxu0 0
        %891 = vmatpush2.bf16.msra.mxu0 0
        %892 = vmatprep.subr.bf16.mxu0 0
        %893 = vmatpush2.bf16.msra.mxu0 0
        %894 = vmatprep.mubr.bf16.mxu0 0
        %895 = vmatmul.mubr.bf16.gmra.mxu0 %v851
        %v896 = vpop.f32.mrf.mxu0
        %v897 = vadd.f32 0.0, %v896
        %v898 = vpop.f32.mrf.mxu0
        %v899 = vpop.f32.mrf.mxu0
        %v900 = vadd.f32 0.0, %v899
        %v901 = vpop.f32.mrf.mxu0
        %902 = vmatprep.mubr.bf16.mxu0 0
        %903 = vmatmul.mubr.bf16.gmra.mxu0 %v854
        %v904 = vpop.f32.mrf.mxu0
        %v905 = vadd.f32 0.0, %v904
        %v906 = vpop.f32.mrf.mxu0
        %v907 = vpop.f32.mrf.mxu0
        %v908 = vadd.f32 0.0, %v907
        %v909 = vpop.f32.mrf.mxu0
        %910 = vmatprep.mubr.bf16.mxu0 0
        %911 = vmatmul.mubr.bf16.gmra.mxu0 %v857
        %v912 = vpop.f32.mrf.mxu0
        %v913 = vadd.f32 0.0, %v912
        %v914 = vpop.f32.mrf.mxu0
        %v915 = vpop.f32.mrf.mxu0
        %v916 = vadd.f32 0.0, %v915
        %v917 = vpop.f32.mrf.mxu0
        %918 = vmatprep.mubr.bf16.mxu0 0
        %919 = vmatmul.mubr.bf16.gmra.mxu0 %v860
        %v920 = vpop.f32.mrf.mxu0
        %v921 = vadd.f32 0.0, %v920
        %v922 = vpop.f32.mrf.mxu0
        %v923 = vpop.f32.mrf.mxu0
        %v924 = vadd.f32 0.0, %v923
        %v925 = vpop.f32.mrf.mxu0
        %926 = vdwg.mxu0
        %v927 = vadd.f32 %v806, %v897
        %v928 = vadd.f32 %v807, %v900
        %v929 = vadd.f32 %v808, %v905
        %v930 = vadd.f32 %v809, %v908
        %v931 = vadd.f32 %v810, %v913
        %v932 = vadd.f32 %v811, %v916
        %v933 = vadd.f32 %v812, %v921
        %v934 = vadd.f32 %v813, %v924
        %935 = vst.msk [vmem:[#allocation4] sm:$0xff] %vm483, %v927
        %936 = vst.msk [vmem:[#allocation4 + $0x8] sm:$0xff] %vm483, %v928
        %937 = vst.msk [vmem:[#allocation4 + $0x10] sm:$0xff] %vm483, %v929
        %938 = vst.msk [vmem:[#allocation4 + $0x18] sm:$0xff] %vm483, %v930
        %939 = vst.msk [vmem:[#allocation4 + $0x20] sm:$0xff] %vm483, %v931
        %940 = vst.msk [vmem:[#allocation4 + $0x28] sm:$0xff] %vm483, %v932
        %941 = vst.msk [vmem:[#allocation4 + $0x30] sm:$0xff] %vm483, %v933
        %942 = vst.msk [vmem:[#allocation4 + $0x38] sm:$0xff] %vm483, %v934
        %943 = vst.msk [vmem:[#allocation2] sm:$0xff] %vm749, %v605
        %944 = vst.msk [vmem:[#allocation2 + $0x8] sm:$0xff] %vm749, %v606
        %945 = vst.msk [vmem:[#allocation2 + $0x10] sm:$0xff] %vm749, %v607
        %946 = vst.msk [vmem:[#allocation2 + $0x18] sm:$0xff] %vm749, %v608
        %947 = vst.msk [vmem:[#allocation2 + $0x20] sm:$0xff] %vm749, %v609
        %948 = vst.msk [vmem:[#allocation2 + $0x28] sm:$0xff] %vm749, %v610
        %949 = vst.msk [vmem:[#allocation2 + $0x30] sm:$0xff] %vm749, %v611
        %950 = vst.msk [vmem:[#allocation2 + $0x38] sm:$0xff] %vm749, %v612
        // Predicated region
        $region49: #{attn_block.5} parent=43 // pred_check
          %p951 = pneg %p397
        $region50: #{attn_block.5} parent=43 // pred_check_branch
          %953 = sbr.rel (%p951) target = $region52
        $region51: #{attn_block.5} parent=43 // pred_region
          %v954 = vld [vmem:[#allocation3] sm:$0xff]
          %v955 = vld [vmem:[#allocation3 + $0x8] sm:$0xff]
          %v956 = vld [vmem:[#allocation3 + $0x10] sm:$0xff]
          %v957 = vld [vmem:[#allocation3 + $0x18] sm:$0xff]
          %v958 = vld [vmem:[#allocation3 + $0x20] sm:$0xff]
          %v959 = vld [vmem:[#allocation3 + $0x28] sm:$0xff]
          %v960 = vld [vmem:[#allocation3 + $0x30] sm:$0xff]
          %v961 = vld [vmem:[#allocation3 + $0x38] sm:$0xff]
          %v962 = vrcp.pop %v954
          %v963 = vrcp.pop %v955
          %v964 = vrcp.pop %v956
          %v965 = vrcp.pop %v957
          %v966 = vrcp.pop %v958
          %v967 = vrcp.pop %v959
          %v968 = vrcp.pop %v960
          %v969 = vrcp.pop %v961
          %v970 = vld [vmem:[#allocation4] sm:$0xff]
          %v971 = vld [vmem:[#allocation4 + $0x8] sm:$0xff]
          %v972 = vld [vmem:[#allocation4 + $0x10] sm:$0xff]
          %v973 = vld [vmem:[#allocation4 + $0x18] sm:$0xff]
          %v974 = vld [vmem:[#allocation4 + $0x20] sm:$0xff]
          %v975 = vld [vmem:[#allocation4 + $0x28] sm:$0xff]
          %v976 = vld [vmem:[#allocation4 + $0x30] sm:$0xff]
          %v977 = vld [vmem:[#allocation4 + $0x38] sm:$0xff]
          %979 = vset.pattern.permute.xlu0 0
          %980 = vperm.xlu0 %979, %v962
          %v981 = vpop.permute.xlu0 %980
          %984 = vset.pattern.permute.xlu0 0
          %985 = vperm.xlu0 %984, %v963
          %v986 = vpop.permute.xlu0 %985
          %989 = vset.pattern.permute.xlu0 0
          %990 = vperm.xlu0 %989, %v964
          %v991 = vpop.permute.xlu0 %990
          %994 = vset.pattern.permute.xlu0 0
          %995 = vperm.xlu0 %994, %v965
          %v996 = vpop.permute.xlu0 %995
          %999 = vset.pattern.permute.xlu0 0
          %1000 = vperm.xlu0 %999, %v966
          %v1001 = vpop.permute.xlu0 %1000
          %1004 = vset.pattern.permute.xlu0 0
          %1005 = vperm.xlu0 %1004, %v967
          %v1006 = vpop.permute.xlu0 %1005
          %1009 = vset.pattern.permute.xlu0 0
          %1010 = vperm.xlu0 %1009, %v968
          %v1011 = vpop.permute.xlu0 %1010
          %1014 = vset.pattern.permute.xlu0 0
          %1015 = vperm.xlu0 %1014, %v969
          %v1016 = vpop.permute.xlu0 %1015
          %v1018 = vmul.f32 %v970, %v981
          %v1019 = vmul.f32 %v971, %v986
          %v1020 = vmul.f32 %v972, %v991
          %v1021 = vmul.f32 %v973, %v996
          %v1022 = vmul.f32 %v974, %v1001
          %v1023 = vmul.f32 %v975, %v1006
          %v1024 = vmul.f32 %v976, %v1011
          %v1025 = vmul.f32 %v977, %v1016
          %v1026 = vpack.c.bf16 %v1019, %v1018
          %v1027 = vpack.c.bf16 %v1021, %v1020
          %v1028 = vpack.c.bf16 %v1023, %v1022
          %v1029 = vpack.c.bf16 %v1025, %v1024
          %v1030 = vld [vmem:[%s4] sm:$0xf]
          %v1031 = vld [vmem:[%s4 + $0x4] sm:$0xf]
          %v1032 = vld [vmem:[%s4 + $0x8] sm:$0xf]
          %v1033 = vld [vmem:[%s4 + $0xc] sm:$0xf]
          %v1034 = vld [vmem:[%s4 + $0x10] sm:$0xf]
          %v1035 = vld [vmem:[%s4 + $0x14] sm:$0xf]
          %v1036 = vld [vmem:[%s4 + $0x18] sm:$0xf]
          %v1037 = vld [vmem:[%s4 + $0x1c] sm:$0xf]
          %v1038 = vld [vmem:[%s5] sm:$0x1]
          %v1040 = vlaneseq
          %v1041 = vshrl.u32 %v1040, 7
          %v1042 = vsub.s32 0, %v1041
          %v1043 = vrot.slane %v1038, %v1042
          %v1053 = vunpack.c.l.b16 %v1030
          %v1054 = vunpack.c.l.b16 %v1031
          %v1055 = vunpack.c.l.b16 %v1032
          %v1056 = vunpack.c.l.b16 %v1033
          %v1057 = vunpack.c.l.b16 %v1034
          %v1058 = vunpack.c.l.b16 %v1035
          %v1059 = vunpack.c.l.b16 %v1036
          %v1060 = vunpack.c.l.b16 %v1037
          %v1061 = vpack.c.b16 %v1054, %v1053
          %v1062 = vpack.c.b16 %v1056, %v1055
          %v1063 = vpack.c.b16 %v1058, %v1057
          %v1064 = vpack.c.b16 %v1060, %v1059
          %v1070 = vsel %vm483, %v1026, 0
          %v1073 = vsel %vm483, %v1027, 0
          %v1076 = vsel %vm483, %v1028, 0
          %v1079 = vsel %vm483, %v1029, 0
          %1081 = vmatprep.subr.bf16.mxu0 0
          %1082 = vmatpush1.bf16.msra.mxu0 0
          %1083 = vmatprep.subr.bf16.mxu0 0
          %1084 = vmatpush1.bf16.msra.mxu0 0
          %1085 = vmatprep.subr.bf16.mxu0 0
          %1086 = vmatpush1.bf16.msra.mxu0 0
          %1087 = vmatprep.subr.bf16.mxu0 0
          %1088 = vmatpush1.bf16.msra.mxu0 0
          %1089 = vmatprep.subr.bf16.mxu0 0
          %1090 = vmatpush1.bf16.msra.mxu0 %v1064
          %1091 = vmatprep.subr.bf16.mxu0 0
          %1092 = vmatpush1.bf16.msra.mxu0 %v1063
          %1093 = vmatprep.subr.bf16.mxu0 0
          %1094 = vmatpush1.bf16.msra.mxu0 %v1062
          %1095 = vmatprep.subr.bf16.mxu0 0
          %1096 = vmatpush1.bf16.msra.mxu0 %v1061
          %1097 = vmatprep.subr.bf16.mxu0 0
          %1098 = vmatpush2.bf16.msra.mxu0 0
          %1099 = vmatprep.subr.bf16.mxu0 0
          %1100 = vmatpush2.bf16.msra.mxu0 0
          %1101 = vmatprep.subr.bf16.mxu0 0
          %1102 = vmatpush2.bf16.msra.mxu0 0
          %1103 = vmatprep.subr.bf16.mxu0 0
          %1104 = vmatpush2.bf16.msra.mxu0 0
          %1105 = vmatprep.subr.bf16.mxu0 0
          %1106 = vmatpush2.bf16.msra.mxu0 0
          %1107 = vmatprep.subr.bf16.mxu0 0
          %1108 = vmatpush2.bf16.msra.mxu0 0
          %1109 = vmatprep.subr.bf16.mxu0 0
          %1110 = vmatpush2.bf16.msra.mxu0 0
          %1111 = vmatprep.subr.bf16.mxu0 0
          %1112 = vmatpush2.bf16.msra.mxu0 0
          %1113 = vmatprep.mubr.bf16.mxu0 0
          %1114 = vmatmul.mubr.bf16.gmra.mxu0 %v1070
          %v1115 = vpop.f32.mrf.mxu0
          %v1116 = vadd.f32 %v1043, %v1115
          %v1117 = vpop.f32.mrf.mxu0
          %v1118 = vpop.f32.mrf.mxu0
          %v1119 = vadd.f32 %v1043, %v1118
          %v1120 = vpop.f32.mrf.mxu0
          %1121 = vmatprep.mubr.bf16.mxu0 0
          %1122 = vmatmul.mubr.bf16.gmra.mxu0 %v1073
          %v1123 = vpop.f32.mrf.mxu0
          %v1124 = vadd.f32 %v1043, %v1123
          %v1125 = vpop.f32.mrf.mxu0
          %v1126 = vpop.f32.mrf.mxu0
          %v1127 = vadd.f32 %v1043, %v1126
          %v1128 = vpop.f32.mrf.mxu0
          %1129 = vmatprep.mubr.bf16.mxu0 0
          %1130 = vmatmul.mubr.bf16.gmra.mxu0 %v1076
          %v1131 = vpop.f32.mrf.mxu0
          %v1132 = vadd.f32 %v1043, %v1131
          %v1133 = vpop.f32.mrf.mxu0
          %v1134 = vpop.f32.mrf.mxu0
          %v1135 = vadd.f32 %v1043, %v1134
          %v1136 = vpop.f32.mrf.mxu0
          %1137 = vmatprep.mubr.bf16.mxu0 0
          %1138 = vmatmul.mubr.bf16.gmra.mxu0 %v1079
          %v1139 = vpop.f32.mrf.mxu0
          %v1140 = vadd.f32 %v1043, %v1139
          %v1141 = vpop.f32.mrf.mxu0
          %v1142 = vpop.f32.mrf.mxu0
          %v1143 = vadd.f32 %v1043, %v1142
          %v1144 = vpop.f32.mrf.mxu0
          %1145 = vdwg.mxu0
          %v1146 = vld [vmem:[%s393] sm:$0xff]
          %v1147 = vld [vmem:[%s393 + $0x8] sm:$0xff]
          %v1148 = vld [vmem:[%s393 + $0x10] sm:$0xff]
          %v1149 = vld [vmem:[%s393 + $0x18] sm:$0xff]
          %v1150 = vld [vmem:[%s393 + $0x20] sm:$0xff]
          %v1151 = vld [vmem:[%s393 + $0x28] sm:$0xff]
          %v1152 = vld [vmem:[%s393 + $0x30] sm:$0xff]
          %v1153 = vld [vmem:[%s393 + $0x38] sm:$0xff]
          %v1154 = vadd.f32 %v1146, %v1116
          %v1155 = vadd.f32 %v1147, %v1119
          %v1156 = vadd.f32 %v1148, %v1124
          %v1157 = vadd.f32 %v1149, %v1127
          %v1158 = vadd.f32 %v1150, %v1132
          %v1159 = vadd.f32 %v1151, %v1135
          %v1160 = vadd.f32 %v1152, %v1140
          %v1161 = vadd.f32 %v1153, %v1143
          %1162 = vst.msk [vmem:[%s354] sm:$0xff] %vm483, %v1154
          %1163 = vst.msk [vmem:[%s354 + $0x8] sm:$0xff] %vm483, %v1155
          %1164 = vst.msk [vmem:[%s354 + $0x10] sm:$0xff] %vm483, %v1156
          %1165 = vst.msk [vmem:[%s354 + $0x18] sm:$0xff] %vm483, %v1157
          %1166 = vst.msk [vmem:[%s354 + $0x20] sm:$0xff] %vm483, %v1158
          %1167 = vst.msk [vmem:[%s354 + $0x28] sm:$0xff] %vm483, %v1159
          %1168 = vst.msk [vmem:[%s354 + $0x30] sm:$0xff] %vm483, %v1160
          %1169 = vst.msk [vmem:[%s354 + $0x38] sm:$0xff] %vm483, %v1161
        $region52: #{attn_block.5} parent=43 // pred_fallthru
          _
        %s1170 = sand.u32 %s203, 1
        %s1171 = scalar_lea.sflag [#allocation6], %s1170
        %s1172 = sand.u32 %s203, 1
        %s1173 = smul.addr %s1172, 64
        %s1174 = scalar_lea.vmem [#allocation5], %s1173
        // Predicated region
        $region53: #{attn_block.5} parent=43 // pred_check
          %p1175 = pneg %p213
        $region54: #{attn_block.5} parent=43 // pred_check_branch
          %1177 = sbr.rel (%p1175) target = $region56
        $region55: #{attn_block.5} parent=43 // pred_region
          %s1178 = smul.u32 8, %s26
          %s1180 = ssub.s32 1024, 1024
          %1181 = vsyncadd %s1171, %s1180
          %s1182 = smul.addr %s25, 8
          %s1183 = sadd.s32 %s1178, %s1182
          %s1184 = smul.addr %s1183, 128
          %s1185 = scalar_lea.hbm %s6, %s1184
          %s1186 = sshll.u32 %s1174, 4
          %s1187 = int_to_ptr.vmem [resolvable:$true] %s1186
          %1192 = dma.vmem_to_hbm [thread:$0]  %s1187, 1024, %s1185, %s1171, 128, 128, 8
        $region56: #{attn_block.5} parent=43 // pred_fallthru
          _
      $region44: #{attn_block.5} parent=5 // pred_fallthru
        _
      %p1193 = scmp.le.s32.totalorder 2, %s15
      // Predicated region
      $region57: #{attn_block.5} parent=5 // pred_check
        %p1194 = pneg %p1193
      $region58: #{attn_block.5} parent=5 // pred_check_branch
        %1196 = sbr.rel (%p1194) target = $region60
      $region59: #{attn_block.5} parent=5 // pred_region
        %s1197 = ssub.s32 %s15, 2
        // Predicated region
        $region61: #{attn_block.5} parent=59 // pred_check
          %p1198 = pneg %p219
        $region62: #{attn_block.5} parent=59 // pred_check_branch
          %1200 = sbr.rel (%p1198) target = $region64
        $region63: #{attn_block.5} parent=59 // pred_region
          %s1201 = sand.u32 %s204, 1
          %s1202 = scalar_lea.sflag [#allocation6], %s1201
          %s1203 = sand.u32 %s204, 1
          %s1204 = smul.addr %s1203, 64
          %s1205 = scalar_lea.vmem [#allocation5], %s1204
          %1206 = dma.done %s1202, 1024
        $region64: #{attn_block.5} parent=59 // pred_fallthru
          _
      $region60: #{attn_block.5} parent=5 // pred_fallthru
        _
    $region6: #{attn_block.5} parent=1 // loop_footer
      %s19 = sadd.s32 1, %s15
    $region7: #{attn_block.5} parent=1 // loop_footer_branch
      %14 = sbr.rel target = $region3
    $region8: #{attn_block.5} parent=1 // loop_exit
      _
    %1207 = vsyncpa [#allocation6], 1
    %s1208 = scalar_lea.sflag [#allocation6], 1
    %1209 = vsyncpa %s1208, 1

</llo_original>
